<compile_context>
chip_gen: v5e
topology: v5e:2x2
jax: 0.10.0
libtpu: 0.0.40
codegen_flags: <defaults>
</compile_context>

<pallas_src>
import functools

import numpy as np

import jax
import jax.numpy as jnp
from jax.experimental import pallas as pl
from jax.experimental.pallas import tpu as pltpu

_CPAD = 8      # channels padded to one sublane tile
_GUARD = 128   # zeroed guard lanes on each side of the activation scratch
_LANE = 128


def _round_up(a: int, b: int) -> int:
    return -(-a // b) * b


def _alinet_kernel(x_ref, mask_ref, wb_ref, o_ref, act_ref, *,
                   n_layers, cpad, guard, length, tap_offsets, cout_final):
    """Fused 3-conv forward; all intermediates stay in VMEM/vregs.

    x_ref   : (cpad, guard + length + guard)   padded-layout input, guards = 0
    mask_ref: (1, length)                      1.0 on interior pixels, else 0.0
    wb_ref  : (n_layers, cpad, 9*cpad + 1)     packed weights | bias column
    o_ref   : (cout_final, length)             last conv output (padded layout)
    act_ref : VMEM scratch, same shape as x_ref (current activation)
    """
    kdim = len(tap_offsets) * cpad
    # Guard lanes / padding ring arrive zeroed from the host and are never
    # overwritten, so every out-of-image tap source reads an exact zero.
    act_ref[...] = x_ref[...].astype(act_ref.dtype)
    interior = mask_ref[...]                                   # (1, length)

    for l in range(n_layers):
        # 9 shifted tap slabs as plain offset loads from VMEM ('same' zero
        # padding comes from the zeroed ring/guard lanes, no roll, no masks).
        slab = jnp.concatenate(
            [act_ref[:, guard + off: guard + off + length] for off in tap_offsets],
            axis=0)                                            # (9*cpad, length)
        w = wb_ref[l, :, :kdim]                                # (cpad, 9*cpad)
        b = wb_ref[l, :, kdim:kdim + 1]                        # (cpad, 1)
        h = jnp.dot(w, slab, precision=jax.lax.Precision.DEFAULT,
                    preferred_element_type=jnp.float32) + b    # (cpad, length)
        if l + 1 < n_layers:
            # Single VPU multiply re-zeroes the padding ring (and the lane
            # padding tail) before the next layer's offset loads.
            act_ref[:, guard:guard + length] = h * interior
        else:
            o_ref[...] = h[:cout_final].astype(o_ref.dtype)


def _pack_params(params):
    """Pack [(w_oihw, b)] into (n_layers, CPAD, 9*CPAD + 1).

    Column t*CPAD + ci holds W[co, ci, kh, kw] with t = kh*3 + kw; the last
    column holds the bias.  Rows/columns beyond the real channel counts are
    zero, so padded activation channels stay exactly zero through all layers.
    """
    layers = []
    for w, b in params:
        cout, cin, kh, kw = w.shape
        assert (kh, kw) == (3, 3) and cout <= _CPAD and cin <= _CPAD
        wt = jnp.transpose(w, (0, 2, 3, 1)).reshape(cout, 9, cin)   # tap-major
        wt = jnp.pad(wt, ((0, _CPAD - cout), (0, 0), (0, _CPAD - cin)))
        wt = wt.reshape(_CPAD, 9 * _CPAD)
        bp = jnp.pad(b, (0, _CPAD - cout)).reshape(_CPAD, 1)
        layers.append(jnp.concatenate([wt, bp], axis=1))            # (8, 73)
    return jnp.stack(layers, axis=0)


@jax.jit
def alinet_forward(x_nchw, params):
    """AliNet forward pass (NCHW in, NCHW out) as one fused Pallas kernel."""
    N, C0, H, W = x_nchw.shape
    Hp, Wp = H + 2, W + 2                     # zero-padded image
    img = Hp * Wp
    stride = _round_up(img, _LANE)            # per-image lane stride
    L = N * stride                            # batch folded onto the lane axis
    n_layers = len(params)
    cout_final = params[-1][1].shape[0]

    # ---- host-side layout prep (tiny XLA ops) -------------------------------
    xp = jnp.pad(x_nchw, ((0, 0), (0, 0), (1, 1), (1, 1)))          # (N,C0,Hp,Wp)
    xp = jnp.transpose(xp, (1, 0, 2, 3)).reshape(C0, N, img)
    xp = jnp.pad(xp, ((0, _CPAD - C0), (0, 0), (0, stride - img)))
    x_buf = jnp.pad(xp.reshape(_CPAD, L), ((0, 0), (_GUARD, _GUARD)))

    m2 = np.zeros((Hp, Wp), np.float32)
    m2[1:H + 1, 1:W + 1] = 1.0
    mrow = np.zeros((stride,), np.float32)
    mrow[:img] = m2.reshape(-1)
    interior = jnp.asarray(np.tile(mrow, N)[None, :])               # (1, L)

    wb = _pack_params(params)                                       # (3, 8, 73)

    # Tap t = kh*3 + kw fetches the neighbor at (h + kh - 1, w + kw - 1).
    tap_offsets = tuple((kh - 1) * Wp + (kw - 1)
                        for kh in range(3) for kw in range(3))
    assert _GUARD >= max(abs(o) for o in tap_offsets)

    kernel = functools.partial(
        _alinet_kernel, n_layers=n_layers, cpad=_CPAD, guard=_GUARD,
        length=L, tap_offsets=tap_offsets, cout_final=cout_final)

    out_flat = pl.pallas_call(
        kernel,
        out_shape=jax.ShapeDtypeStruct((cout_final, L), x_nchw.dtype),
        in_specs=[pl.BlockSpec(memory_space=pltpu.MemorySpace.VMEM)] * 3,
        out_specs=pl.BlockSpec(memory_space=pltpu.MemorySpace.VMEM),
        scratch_shapes=[pltpu.VMEM((_CPAD, L + 2 * _GUARD), jnp.float32)],
        # NOTE: for large H*W*N switch to a grid over row/batch tiles with a
        # 2-row halo, mark it "parallel" (>=2 blocks so both v7x TCs are fed),
        # and size tiles from v7x's 64 MiB VMEM (raising vmem_limit_bytes past
        # the 32 MiB scoped default).  At 2x3x16x16 one step is fastest.
    )(x_buf, interior, wb)

    # ---- undo the padded layout ----------------------------------------------
    out = out_flat.reshape(cout_final, N, stride)[:, :, :img]
    out = out.reshape(cout_final, N, Hp, Wp)[:, :, 1:H + 1, 1:W + 1]
    return jnp.transpose(out, (1, 0, 2, 3))                         # (N,Cout,H,W)


def init_alinet_params(key):
    """Deterministic params for the default AliNet architecture:
       conv0: 3->6, conv1: 6->6, conv2: 6->6, all 3x3 / stride 1 / padding 1.
       PyTorch Conv2d default init bounds (uniform +/- 1/sqrt(fan_in)).
       Stored PyTorch-native: w as OIHW (cout, cin, 3, 3), b as (cout,)."""
    # TODO(synk): the architect_file/exec-eval dynamic-architecture path of
    # AliNet.__init__ is Python metaprogramming, not a tensor op; only the
    # default 3-conv architecture is implemented.
    specs = [(3, 6), (6, 6), (6, 6)]
    params = []
    for i, (cin, cout) in enumerate(specs):
        kw_key, kb_key = jax.random.split(jax.random.fold_in(key, i))
        bound = 1.0 / float(cin * 9) ** 0.5
        w = jax.random.uniform(kw_key, (cout, cin, 3, 3), jnp.float32,
                               -bound, bound)
        b = jax.random.uniform(kb_key, (cout,), jnp.float32, -bound, bound)
        params.append((w, b))
    return params


def alinet_reference(x_nchw, params):
    """Pure-XLA reference (lax.conv), NCHW end to end."""
    x = x_nchw
    for w, b in params:
        x = jax.lax.conv_general_dilated(
            x, w, window_strides=(1, 1), padding="SAME",
            dimension_numbers=("NCHW", "OIHW", "NCHW")) + b.reshape(1, -1, 1, 1)
    return x


if __name__ == "__main__":
    root = jax.random.PRNGKey(0)
    key_params, key_x = jax.random.split(root)

    params = init_alinet_params(key_params)
    x = jax.random.normal(key_x, (2, 3, 16, 16), dtype=jnp.float32)  # NCHW

    out = jax.block_until_ready(alinet_forward(x, params))
    assert out.shape == (2, 6, 16, 16), out.shape

    ref = alinet_reference(x, params)
    assert jnp.allclose(out, ref, rtol=1e-4, atol=1e-4), \
        float(jnp.max(jnp.abs(out - ref)))

    print("KERNEL_OK")
</pallas_src>

<mosaic_0001>
module attributes {stable_mosaic.version = 11 : i64} {
  func.func @_alinet_kernel(%arg0: memref<8x1024xf32, #tpu.memory_space<vmem>>, %arg1: memref<1x768xf32, #tpu.memory_space<vmem>>, %arg2: memref<3x8x73xf32, #tpu.memory_space<vmem>>, %arg3: memref<6x768xf32, #tpu.memory_space<vmem>>, %arg4: memref<8x1024xf32, #tpu.memory_space<vmem>>) attributes {dimension_semantics = [], scalar_prefetch = 0 : i64, scratch_operands = 1 : i64, tpu.core_type = #tpu.core_type<tc>} {
    %c0 = arith.constant 0 : index
    %c0_0 = arith.constant 0 : index
    %0 = vector.load %arg0[%c0, %c0_0] : memref<8x1024xf32, #tpu.memory_space<vmem>>, vector<8x1024xf32>
    %c0_1 = arith.constant 0 : index
    %c0_2 = arith.constant 0 : index
    %1 = vector.load %arg4[%c0_1, %c0_2] : memref<8x1024xf32, #tpu.memory_space<vmem>>, vector<8x1024xf32>
    tpu.vector_store %arg4[%c0_1, %c0_2], %0 {strides = array<i32>} : memref<8x1024xf32, #tpu.memory_space<vmem>>, vector<8x1024xf32>,
    %c0_3 = arith.constant 0 : index
    %c0_4 = arith.constant 0 : index
    %2 = vector.load %arg1[%c0_3, %c0_4] : memref<1x768xf32, #tpu.memory_space<vmem>>, vector<1x768xf32>
    %c0_5 = arith.constant 0 : index
    %c109 = arith.constant 109 : index
    %3 = vector.load %arg4[%c0_5, %c109] : memref<8x1024xf32, #tpu.memory_space<vmem>>, vector<8x768xf32>
    %c0_6 = arith.constant 0 : index
    %c110 = arith.constant 110 : index
    %4 = vector.load %arg4[%c0_6, %c110] : memref<8x1024xf32, #tpu.memory_space<vmem>>, vector<8x768xf32>
    %c0_7 = arith.constant 0 : index
    %c111 = arith.constant 111 : index
    %5 = vector.load %arg4[%c0_7, %c111] : memref<8x1024xf32, #tpu.memory_space<vmem>>, vector<8x768xf32>
    %c0_8 = arith.constant 0 : index
    %c127 = arith.constant 127 : index
    %6 = vector.load %arg4[%c0_8, %c127] : memref<8x1024xf32, #tpu.memory_space<vmem>>, vector<8x768xf32>
    %c0_9 = arith.constant 0 : index
    %c128 = arith.constant 128 : index
    %7 = vector.load %arg4[%c0_9, %c128] : memref<8x1024xf32, #tpu.memory_space<vmem>>, vector<8x768xf32>
    %c0_10 = arith.constant 0 : index
    %c129 = arith.constant 129 : index
    %8 = vector.load %arg4[%c0_10, %c129] : memref<8x1024xf32, #tpu.memory_space<vmem>>, vector<8x768xf32>
    %c0_11 = arith.constant 0 : index
    %c145 = arith.constant 145 : index
    %9 = vector.load %arg4[%c0_11, %c145] : memref<8x1024xf32, #tpu.memory_space<vmem>>, vector<8x768xf32>
    %c0_12 = arith.constant 0 : index
    %c146 = arith.constant 146 : index
    %10 = vector.load %arg4[%c0_12, %c146] : memref<8x1024xf32, #tpu.memory_space<vmem>>, vector<8x768xf32>
    %c0_13 = arith.constant 0 : index
    %c147 = arith.constant 147 : index
    %11 = vector.load %arg4[%c0_13, %c147] : memref<8x1024xf32, #tpu.memory_space<vmem>>, vector<8x768xf32>
    %12 = tpu.concatenate %3, %4, %5, %6, %7, %8, %9, %10, %11 in 0 : vector<8x768xf32>, vector<8x768xf32>, vector<8x768xf32>, vector<8x768xf32>, vector<8x768xf32>, vector<8x768xf32>, vector<8x768xf32>, vector<8x768xf32>, vector<8x768xf32> -> vector<72x768xf32>
    %c0_14 = arith.constant 0 : index
    %c0_15 = arith.constant 0 : index
    %c0_16 = arith.constant 0 : index
    %13 = vector.load %arg2[%c0_14, %c0_15, %c0_16] : memref<3x8x73xf32, #tpu.memory_space<vmem>>, vector<1x8x72xf32>
    %14 = vector.shape_cast %13 : vector<1x8x72xf32> to vector<8x72xf32>
    %c0_17 = arith.constant 0 : index
    %c0_18 = arith.constant 0 : index
    %c72 = arith.constant 72 : index
    %15 = vector.load %arg2[%c0_17, %c0_18, %c72] : memref<3x8x73xf32, #tpu.memory_space<vmem>>, vector<1x8x1xf32>
    %16 = vector.shape_cast %15 : vector<1x8x1xf32> to vector<8x1xf32>
    %cst = arith.constant dense<0.000000e+00> : vector<8x768xf32>
    %17 = tpu.matmul %14, %12, %cst {dimension_numbers = #tpu.dot_dimension_numbers<[1], [0], [0], [1], [0, 0, 1, 1], [], []>} : vector<8x72xf32>, vector<72x768xf32>, vector<8x768xf32> -> vector<8x768xf32>
    %18 = vector.broadcast %16 : vector<8x1xf32> to vector<8x768xf32>
    %19 = arith.addf %17, %18 : vector<8x768xf32>
    %20 = vector.broadcast %2 : vector<1x768xf32> to vector<8x768xf32>
    %21 = arith.mulf %19, %20 : vector<8x768xf32>
    %c0_19 = arith.constant 0 : index
    %c128_20 = arith.constant 128 : index
    %22 = vector.load %arg4[%c0_19, %c128_20] : memref<8x1024xf32, #tpu.memory_space<vmem>>, vector<8x768xf32>
    tpu.vector_store %arg4[%c0_19, %c128_20], %21 {strides = array<i32>} : memref<8x1024xf32, #tpu.memory_space<vmem>>, vector<8x768xf32>,
    %c0_21 = arith.constant 0 : index
    %c109_22 = arith.constant 109 : index
    %23 = vector.load %arg4[%c0_21, %c109_22] : memref<8x1024xf32, #tpu.memory_space<vmem>>, vector<8x768xf32>
    %c0_23 = arith.constant 0 : index
    %c110_24 = arith.constant 110 : index
    %24 = vector.load %arg4[%c0_23, %c110_24] : memref<8x1024xf32, #tpu.memory_space<vmem>>, vector<8x768xf32>
    %c0_25 = arith.constant 0 : index
    %c111_26 = arith.constant 111 : index
    %25 = vector.load %arg4[%c0_25, %c111_26] : memref<8x1024xf32, #tpu.memory_space<vmem>>, vector<8x768xf32>
    %c0_27 = arith.constant 0 : index
    %c127_28 = arith.constant 127 : index
    %26 = vector.load %arg4[%c0_27, %c127_28] : memref<8x1024xf32, #tpu.memory_space<vmem>>, vector<8x768xf32>
    %c0_29 = arith.constant 0 : index
    %c128_30 = arith.constant 128 : index
    %27 = vector.load %arg4[%c0_29, %c128_30] : memref<8x1024xf32, #tpu.memory_space<vmem>>, vector<8x768xf32>
    %c0_31 = arith.constant 0 : index
    %c129_32 = arith.constant 129 : index
    %28 = vector.load %arg4[%c0_31, %c129_32] : memref<8x1024xf32, #tpu.memory_space<vmem>>, vector<8x768xf32>
    %c0_33 = arith.constant 0 : index
    %c145_34 = arith.constant 145 : index
    %29 = vector.load %arg4[%c0_33, %c145_34] : memref<8x1024xf32, #tpu.memory_space<vmem>>, vector<8x768xf32>
    %c0_35 = arith.constant 0 : index
    %c146_36 = arith.constant 146 : index
    %30 = vector.load %arg4[%c0_35, %c146_36] : memref<8x1024xf32, #tpu.memory_space<vmem>>, vector<8x768xf32>
    %c0_37 = arith.constant 0 : index
    %c147_38 = arith.constant 147 : index
    %31 = vector.load %arg4[%c0_37, %c147_38] : memref<8x1024xf32, #tpu.memory_space<vmem>>, vector<8x768xf32>
    %32 = tpu.concatenate %23, %24, %25, %26, %27, %28, %29, %30, %31 in 0 : vector<8x768xf32>, vector<8x768xf32>, vector<8x768xf32>, vector<8x768xf32>, vector<8x768xf32>, vector<8x768xf32>, vector<8x768xf32>, vector<8x768xf32>, vector<8x768xf32> -> vector<72x768xf32>
    %c1 = arith.constant 1 : index
    %c0_39 = arith.constant 0 : index
    %c0_40 = arith.constant 0 : index
    %33 = vector.load %arg2[%c1, %c0_39, %c0_40] : memref<3x8x73xf32, #tpu.memory_space<vmem>>, vector<1x8x72xf32>
    %34 = vector.shape_cast %33 : vector<1x8x72xf32> to vector<8x72xf32>
    %c1_41 = arith.constant 1 : index
    %c0_42 = arith.constant 0 : index
    %c72_43 = arith.constant 72 : index
    %35 = vector.load %arg2[%c1_41, %c0_42, %c72_43] : memref<3x8x73xf32, #tpu.memory_space<vmem>>, vector<1x8x1xf32>
    %36 = vector.shape_cast %35 : vector<1x8x1xf32> to vector<8x1xf32>
    %cst_44 = arith.constant dense<0.000000e+00> : vector<8x768xf32>
    %37 = tpu.matmul %34, %32, %cst_44 {dimension_numbers = #tpu.dot_dimension_numbers<[1], [0], [0], [1], [0, 0, 1, 1], [], []>} : vector<8x72xf32>, vector<72x768xf32>, vector<8x768xf32> -> vector<8x768xf32>
    %38 = vector.broadcast %36 : vector<8x1xf32> to vector<8x768xf32>
    %39 = arith.addf %37, %38 : vector<8x768xf32>
    %40 = vector.broadcast %2 : vector<1x768xf32> to vector<8x768xf32>
    %41 = arith.mulf %39, %40 : vector<8x768xf32>
    %c0_45 = arith.constant 0 : index
    %c128_46 = arith.constant 128 : index
    %42 = vector.load %arg4[%c0_45, %c128_46] : memref<8x1024xf32, #tpu.memory_space<vmem>>, vector<8x768xf32>
    tpu.vector_store %arg4[%c0_45, %c128_46], %41 {strides = array<i32>} : memref<8x1024xf32, #tpu.memory_space<vmem>>, vector<8x768xf32>,
    %c0_47 = arith.constant 0 : index
    %c109_48 = arith.constant 109 : index
    %43 = vector.load %arg4[%c0_47, %c109_48] : memref<8x1024xf32, #tpu.memory_space<vmem>>, vector<8x768xf32>
    %c0_49 = arith.constant 0 : index
    %c110_50 = arith.constant 110 : index
    %44 = vector.load %arg4[%c0_49, %c110_50] : memref<8x1024xf32, #tpu.memory_space<vmem>>, vector<8x768xf32>
    %c0_51 = arith.constant 0 : index
    %c111_52 = arith.constant 111 : index
    %45 = vector.load %arg4[%c0_51, %c111_52] : memref<8x1024xf32, #tpu.memory_space<vmem>>, vector<8x768xf32>
    %c0_53 = arith.constant 0 : index
    %c127_54 = arith.constant 127 : index
    %46 = vector.load %arg4[%c0_53, %c127_54] : memref<8x1024xf32, #tpu.memory_space<vmem>>, vector<8x768xf32>
    %c0_55 = arith.constant 0 : index
    %c128_56 = arith.constant 128 : index
    %47 = vector.load %arg4[%c0_55, %c128_56] : memref<8x1024xf32, #tpu.memory_space<vmem>>, vector<8x768xf32>
    %c0_57 = arith.constant 0 : index
    %c129_58 = arith.constant 129 : index
    %48 = vector.load %arg4[%c0_57, %c129_58] : memref<8x1024xf32, #tpu.memory_space<vmem>>, vector<8x768xf32>
    %c0_59 = arith.constant 0 : index
    %c145_60 = arith.constant 145 : index
    %49 = vector.load %arg4[%c0_59, %c145_60] : memref<8x1024xf32, #tpu.memory_space<vmem>>, vector<8x768xf32>
    %c0_61 = arith.constant 0 : index
    %c146_62 = arith.constant 146 : index
    %50 = vector.load %arg4[%c0_61, %c146_62] : memref<8x1024xf32, #tpu.memory_space<vmem>>, vector<8x768xf32>
    %c0_63 = arith.constant 0 : index
    %c147_64 = arith.constant 147 : index
    %51 = vector.load %arg4[%c0_63, %c147_64] : memref<8x1024xf32, #tpu.memory_space<vmem>>, vector<8x768xf32>
    %52 = tpu.concatenate %43, %44, %45, %46, %47, %48, %49, %50, %51 in 0 : vector<8x768xf32>, vector<8x768xf32>, vector<8x768xf32>, vector<8x768xf32>, vector<8x768xf32>, vector<8x768xf32>, vector<8x768xf32>, vector<8x768xf32>, vector<8x768xf32> -> vector<72x768xf32>
    %c2 = arith.constant 2 : index
    %c0_65 = arith.constant 0 : index
    %c0_66 = arith.constant 0 : index
    %53 = vector.load %arg2[%c2, %c0_65, %c0_66] : memref<3x8x73xf32, #tpu.memory_space<vmem>>, vector<1x8x72xf32>
    %54 = vector.shape_cast %53 : vector<1x8x72xf32> to vector<8x72xf32>
    %c2_67 = arith.constant 2 : index
    %c0_68 = arith.constant 0 : index
    %c72_69 = arith.constant 72 : index
    %55 = vector.load %arg2[%c2_67, %c0_68, %c72_69] : memref<3x8x73xf32, #tpu.memory_space<vmem>>, vector<1x8x1xf32>
    %56 = vector.shape_cast %55 : vector<1x8x1xf32> to vector<8x1xf32>
    %cst_70 = arith.constant dense<0.000000e+00> : vector<8x768xf32>
    %57 = tpu.matmul %54, %52, %cst_70 {dimension_numbers = #tpu.dot_dimension_numbers<[1], [0], [0], [1], [0, 0, 1, 1], [], []>} : vector<8x72xf32>, vector<72x768xf32>, vector<8x768xf32> -> vector<8x768xf32>
    %58 = vector.broadcast %56 : vector<8x1xf32> to vector<8x768xf32>
    %59 = arith.addf %57, %58 : vector<8x768xf32>
    %60 = vector.extract_strided_slice %59 {offsets = [0, 0], sizes = [6, 768], strides = [1, 1]} : vector<8x768xf32> to vector<6x768xf32>
    %c0_71 = arith.constant 0 : index
    %c0_72 = arith.constant 0 : index
    %61 = vector.load %arg3[%c0_71, %c0_72] : memref<6x768xf32, #tpu.memory_space<vmem>>, vector<6x768xf32>
    tpu.vector_store %arg3[%c0_71, %c0_72], %60 {strides = array<i32>} : memref<6x768xf32, #tpu.memory_space<vmem>>, vector<6x768xf32>,
    return
  }
}

</mosaic_0001>

<llo_original>
// kernel: alinet_forward.1
$region0: #{alinet_forward.1}
  #allocation0 [shape = 'u32[]', space=smem, size = 0x4, offset = 0x4, fixed_abs, tag = 'smem constant byte address 0x4 - core index']
  #allocation1 [shape = 'u32[72,128]{1,0:T(1,128)}', space=vmem, size = 0x9000, scoped, tag = 'internal scratch']
  #allocation2 [shape = 'f32[8,1024]{1,0:T(8,128)}', space=vmem, size = 0x8000, scoped, tag = 'scratch operand']
  %s0 = inlined_call_operand.vmem [shape: f32[8,1024], index: 0, kind: input, shape index: {}]
  %s1 = inlined_call_operand.vmem [shape: f32[1,768], index: 1, kind: input, shape index: {}]
  %s2 = inlined_call_operand.vmem [shape: f32[3,8,73], index: 2, kind: input, shape index: {}]
  %s3 = inlined_call_operand.vmem [shape: f32[6,768], index: 3, kind: output, shape index: {}]
  %s4 = sld [smem:[#allocation0]]
  $region22: #{alinet_forward.1} parent=0
    _
  %s6 = ssub.s32 1, %s4
  %s7 = scalar_select 0, %s6, %s4
  // Predicated region
  $region2: #{alinet_forward.1} parent=0 // pred_check
    _
  $region3: #{alinet_forward.1} parent=0 // pred_check_branch
    %9 = sbr.rel (0) target = $region5
  $region4: #{alinet_forward.1} parent=0 // pred_region
    _
  $region5: #{alinet_forward.1} parent=0 // pred_fallthru
    _
  // Predicated region
  $region6: #{alinet_forward.1} parent=0 // pred_check
    _
  $region7: #{alinet_forward.1} parent=0 // pred_check_branch
    %11 = sbr.rel (0) target = $region9
  $region8: #{alinet_forward.1} parent=0 // pred_region
    _
  $region9: #{alinet_forward.1} parent=0 // pred_fallthru
    _
  // Predicated region
  $region10: #{alinet_forward.1} parent=0 // pred_check
    _
  $region11: #{alinet_forward.1} parent=0 // pred_check_branch
    %13 = sbr.rel (0) target = $region13
  $region12: #{alinet_forward.1} parent=0 // pred_region
    _
  $region13: #{alinet_forward.1} parent=0 // pred_fallthru
    _
  %v14 = vld [vmem:[%s0] sm:$0xff]
  %v15 = vld [vmem:[%s0 + $0x8] sm:$0xff]
  %v16 = vld [vmem:[%s0 + $0x10] sm:$0xff]
  %v17 = vld [vmem:[%s0 + $0x18] sm:$0xff]
  %v18 = vld [vmem:[%s0 + $0x20] sm:$0xff]
  %v19 = vld [vmem:[%s0 + $0x28] sm:$0xff]
  %v20 = vld [vmem:[%s0 + $0x30] sm:$0xff]
  %v21 = vld [vmem:[%s0 + $0x38] sm:$0xff]
  %22 = vst [vmem:[#allocation2] sm:$0xff] %v14
  %23 = vst [vmem:[#allocation2 + $0x8] sm:$0xff] %v15
  %24 = vst [vmem:[#allocation2 + $0x10] sm:$0xff] %v16
  %25 = vst [vmem:[#allocation2 + $0x18] sm:$0xff] %v17
  %26 = vst [vmem:[#allocation2 + $0x20] sm:$0xff] %v18
  %27 = vst [vmem:[#allocation2 + $0x28] sm:$0xff] %v19
  %28 = vst [vmem:[#allocation2 + $0x30] sm:$0xff] %v20
  %29 = vst [vmem:[#allocation2 + $0x38] sm:$0xff] %v21
  %v30 = vld [vmem:[%s1] sm:$0x3f]
  %v31 = vld [vmem:[#allocation2] sm:$0xff]
  %v32 = vld [vmem:[#allocation2 + $0x8] sm:$0xff]
  %v33 = vld [vmem:[#allocation2 + $0x10] sm:$0xff]
  %v34 = vld [vmem:[#allocation2 + $0x18] sm:$0xff]
  %v35 = vld [vmem:[#allocation2 + $0x20] sm:$0xff]
  %v36 = vld [vmem:[#allocation2 + $0x28] sm:$0xff]
  %v37 = vld [vmem:[#allocation2 + $0x30] sm:$0xff]
  %v38 = vld [vmem:[#allocation2 + $0x8] sm:$0xff]
  %v39 = vld [vmem:[#allocation2 + $0x10] sm:$0xff]
  %v40 = vld [vmem:[#allocation2 + $0x18] sm:$0xff]
  %v41 = vld [vmem:[#allocation2 + $0x20] sm:$0xff]
  %v42 = vld [vmem:[#allocation2 + $0x28] sm:$0xff]
  %v43 = vld [vmem:[#allocation2 + $0x30] sm:$0xff]
  %v44 = vld [vmem:[#allocation2 + $0x38] sm:$0xff]
  %52 = vrot.lane.b32.xlu0 %v31, 127
  %v53 = vpop.permute.xlu0 %52
  %54 = vrot.lane.b32.xlu0 %v32, 127
  %v55 = vpop.permute.xlu0 %54
  %56 = vrot.lane.b32.xlu0 %v33, 127
  %v57 = vpop.permute.xlu0 %56
  %58 = vrot.lane.b32.xlu0 %v34, 127
  %v59 = vpop.permute.xlu0 %58
  %60 = vrot.lane.b32.xlu0 %v35, 127
  %v61 = vpop.permute.xlu0 %60
  %62 = vrot.lane.b32.xlu0 %v36, 127
  %v63 = vpop.permute.xlu0 %62
  %64 = vrot.lane.b32.xlu0 %v37, 127
  %v65 = vpop.permute.xlu0 %64
  %vm66 = vcmask 1039360
  %v67 = vsel %vm66, %v53, %v55
  %v68 = vsel %vm66, %v55, %v57
  %v69 = vsel %vm66, %v57, %v59
  %v70 = vsel %vm66, %v59, %v61
  %v71 = vsel %vm66, %v61, %v63
  %v72 = vsel %vm66, %v63, %v65
  %73 = vrot.lane.b32.xlu0 %v31, 126
  %v74 = vpop.permute.xlu0 %73
  %75 = vrot.lane.b32.xlu0 %v32, 126
  %v76 = vpop.permute.xlu0 %75
  %77 = vrot.lane.b32.xlu0 %v33, 126
  %v78 = vpop.permute.xlu0 %77
  %79 = vrot.lane.b32.xlu0 %v34, 126
  %v80 = vpop.permute.xlu0 %79
  %81 = vrot.lane.b32.xlu0 %v35, 126
  %v82 = vpop.permute.xlu0 %81
  %83 = vrot.lane.b32.xlu0 %v36, 126
  %v84 = vpop.permute.xlu0 %83
  %85 = vrot.lane.b32.xlu0 %v37, 126
  %v86 = vpop.permute.xlu0 %85
  %vm87 = vcmask 1031168
  %v88 = vsel %vm87, %v74, %v76
  %v89 = vsel %vm87, %v76, %v78
  %v90 = vsel %vm87, %v78, %v80
  %v91 = vsel %vm87, %v80, %v82
  %v92 = vsel %vm87, %v82, %v84
  %v93 = vsel %vm87, %v84, %v86
  %94 = vrot.lane.b32.xlu0 %v31, 110
  %v95 = vpop.permute.xlu0 %94
  %96 = vrot.lane.b32.xlu0 %v32, 110
  %v97 = vpop.permute.xlu0 %96
  %98 = vrot.lane.b32.xlu0 %v33, 110
  %v99 = vpop.permute.xlu0 %98
  %100 = vrot.lane.b32.xlu0 %v34, 110
  %v101 = vpop.permute.xlu0 %100
  %102 = vrot.lane.b32.xlu0 %v35, 110
  %v103 = vpop.permute.xlu0 %102
  %104 = vrot.lane.b32.xlu0 %v36, 110
  %v105 = vpop.permute.xlu0 %104
  %106 = vrot.lane.b32.xlu0 %v37, 110
  %v107 = vpop.permute.xlu0 %106
  %vm108 = vcmask 900096
  %v109 = vsel %vm108, %v95, %v97
  %v110 = vsel %vm108, %v97, %v99
  %v111 = vsel %vm108, %v99, %v101
  %v112 = vsel %vm108, %v101, %v103
  %v113 = vsel %vm108, %v103, %v105
  %v114 = vsel %vm108, %v105, %v107
  %115 = vrot.lane.b32.xlu0 %v32, 109
  %v116 = vpop.permute.xlu0 %115
  %117 = vrot.lane.b32.xlu0 %v33, 109
  %v118 = vpop.permute.xlu0 %117
  %119 = vrot.lane.b32.xlu0 %v34, 109
  %v120 = vpop.permute.xlu0 %119
  %121 = vrot.lane.b32.xlu0 %v35, 109
  %v122 = vpop.permute.xlu0 %121
  %123 = vrot.lane.b32.xlu0 %v36, 109
  %v124 = vpop.permute.xlu0 %123
  %125 = vrot.lane.b32.xlu0 %v37, 109
  %v126 = vpop.permute.xlu0 %125
  %vm127 = vcmask 891904
  %v128 = vsel %vm127, %v116, %v118
  %v129 = vsel %vm127, %v118, %v120
  %v130 = vsel %vm127, %v120, %v122
  %v131 = vsel %vm127, %v122, %v124
  %v132 = vsel %vm127, %v124, %v126
  %140 = vrot.lane.b32.xlu0 %v38, 108
  %v141 = vpop.permute.xlu0 %140
  %142 = vrot.lane.b32.xlu0 %v39, 108
  %v143 = vpop.permute.xlu0 %142
  %144 = vrot.lane.b32.xlu0 %v40, 108
  %v145 = vpop.permute.xlu0 %144
  %146 = vrot.lane.b32.xlu0 %v41, 108
  %v147 = vpop.permute.xlu0 %146
  %148 = vrot.lane.b32.xlu0 %v42, 108
  %v149 = vpop.permute.xlu0 %148
  %150 = vrot.lane.b32.xlu0 %v43, 108
  %v151 = vpop.permute.xlu0 %150
  %152 = vrot.lane.b32.xlu0 %v44, 108
  %v153 = vpop.permute.xlu0 %152
  %vm154 = vcmask 883712
  %v155 = vsel %vm154, %v141, %v143
  %v156 = vsel %vm154, %v143, %v145
  %v157 = vsel %vm154, %v145, %v147
  %v158 = vsel %vm154, %v147, %v149
  %v159 = vsel %vm154, %v149, %v151
  %v160 = vsel %vm154, %v151, %v153
  %161 = vrot.lane.b32.xlu0 %v38, 92
  %v162 = vpop.permute.xlu0 %161
  %163 = vrot.lane.b32.xlu0 %v39, 92
  %v164 = vpop.permute.xlu0 %163
  %165 = vrot.lane.b32.xlu0 %v40, 92
  %v166 = vpop.permute.xlu0 %165
  %167 = vrot.lane.b32.xlu0 %v41, 92
  %v168 = vpop.permute.xlu0 %167
  %169 = vrot.lane.b32.xlu0 %v42, 92
  %v170 = vpop.permute.xlu0 %169
  %171 = vrot.lane.b32.xlu0 %v43, 92
  %v172 = vpop.permute.xlu0 %171
  %173 = vrot.lane.b32.xlu0 %v44, 92
  %v174 = vpop.permute.xlu0 %173
  %vm175 = vcmask 752640
  %v176 = vsel %vm175, %v162, %v164
  %v177 = vsel %vm175, %v164, %v166
  %v178 = vsel %vm175, %v166, %v168
  %v179 = vsel %vm175, %v168, %v170
  %v180 = vsel %vm175, %v170, %v172
  %v181 = vsel %vm175, %v172, %v174
  %182 = vrot.lane.b32.xlu0 %v38, 91
  %v183 = vpop.permute.xlu0 %182
  %184 = vrot.lane.b32.xlu0 %v39, 91
  %v185 = vpop.permute.xlu0 %184
  %186 = vrot.lane.b32.xlu0 %v40, 91
  %v187 = vpop.permute.xlu0 %186
  %188 = vrot.lane.b32.xlu0 %v41, 91
  %v189 = vpop.permute.xlu0 %188
  %190 = vrot.lane.b32.xlu0 %v42, 91
  %v191 = vpop.permute.xlu0 %190
  %192 = vrot.lane.b32.xlu0 %v43, 91
  %v193 = vpop.permute.xlu0 %192
  %194 = vrot.lane.b32.xlu0 %v44, 91
  %v195 = vpop.permute.xlu0 %194
  %vm196 = vcmask 744448
  %v197 = vsel %vm196, %v183, %v185
  %v198 = vsel %vm196, %v185, %v187
  %v199 = vsel %vm196, %v187, %v189
  %v200 = vsel %vm196, %v189, %v191
  %v201 = vsel %vm196, %v191, %v193
  %v202 = vsel %vm196, %v193, %v195
  %203 = vrot.lane.b32.xlu0 %v38, 90
  %v204 = vpop.permute.xlu0 %203
  %205 = vrot.lane.b32.xlu0 %v39, 90
  %v206 = vpop.permute.xlu0 %205
  %207 = vrot.lane.b32.xlu0 %v40, 90
  %v208 = vpop.permute.xlu0 %207
  %209 = vrot.lane.b32.xlu0 %v41, 90
  %v210 = vpop.permute.xlu0 %209
  %211 = vrot.lane.b32.xlu0 %v42, 90
  %v212 = vpop.permute.xlu0 %211
  %213 = vrot.lane.b32.xlu0 %v43, 90
  %v214 = vpop.permute.xlu0 %213
  %215 = vrot.lane.b32.xlu0 %v44, 90
  %v216 = vpop.permute.xlu0 %215
  %vm217 = vcmask 736256
  %v218 = vsel %vm217, %v204, %v206
  %v219 = vsel %vm217, %v206, %v208
  %v220 = vsel %vm217, %v208, %v210
  %v221 = vsel %vm217, %v210, %v212
  %v222 = vsel %vm217, %v212, %v214
  %v223 = vsel %vm217, %v214, %v216
  %v224 = vld [vmem:[%s2] sm:$0xff]
  %226 = vset.pattern.permute.xlu0 72
  %227 = vperm.xlu0 %226, %v224
  %v228 = vpop.permute.xlu0 %227
  %230 = vrot.lane.b32.xlu0 %v31, 19
  %v231 = vpop.permute.xlu0 %230
  %232 = vrot.lane.b32.xlu0 %v32, 19
  %v233 = vpop.permute.xlu0 %232
  %234 = vrot.lane.b32.xlu0 %v33, 19
  %v235 = vpop.permute.xlu0 %234
  %236 = vrot.lane.b32.xlu0 %v34, 19
  %v237 = vpop.permute.xlu0 %236
  %238 = vrot.lane.b32.xlu0 %v35, 19
  %v239 = vpop.permute.xlu0 %238
  %240 = vrot.lane.b32.xlu0 %v36, 19
  %v241 = vpop.permute.xlu0 %240
  %242 = vrot.lane.b32.xlu0 %v37, 19
  %v243 = vpop.permute.xlu0 %242
  %244 = vrot.lane.b32.xlu0 %v67, 19
  %v245 = vpop.permute.xlu0 %244
  %246 = vrot.lane.b32.xlu0 %v68, 19
  %v247 = vpop.permute.xlu0 %246
  %248 = vrot.lane.b32.xlu0 %v69, 19
  %v249 = vpop.permute.xlu0 %248
  %250 = vrot.lane.b32.xlu0 %v70, 19
  %v251 = vpop.permute.xlu0 %250
  %252 = vrot.lane.b32.xlu0 %v71, 19
  %v253 = vpop.permute.xlu0 %252
  %254 = vrot.lane.b32.xlu0 %v72, 19
  %v255 = vpop.permute.xlu0 %254
  %256 = vrot.lane.b32.xlu0 %v65, 19
  %v257 = vpop.permute.xlu0 %256
  %258 = vrot.lane.b32.xlu0 %v88, 19
  %v259 = vpop.permute.xlu0 %258
  %260 = vrot.lane.b32.xlu0 %v89, 19
  %v261 = vpop.permute.xlu0 %260
  %262 = vrot.lane.b32.xlu0 %v90, 19
  %v263 = vpop.permute.xlu0 %262
  %264 = vrot.lane.b32.xlu0 %v91, 19
  %v265 = vpop.permute.xlu0 %264
  %266 = vrot.lane.b32.xlu0 %v92, 19
  %v267 = vpop.permute.xlu0 %266
  %268 = vrot.lane.b32.xlu0 %v93, 19
  %v269 = vpop.permute.xlu0 %268
  %270 = vrot.lane.b32.xlu0 %v86, 19
  %v271 = vpop.permute.xlu0 %270
  %272 = vrot.lane.b32.xlu0 %v109, 19
  %v273 = vpop.permute.xlu0 %272
  %274 = vrot.lane.b32.xlu0 %v110, 19
  %v275 = vpop.permute.xlu0 %274
  %276 = vrot.lane.b32.xlu0 %v111, 19
  %v277 = vpop.permute.xlu0 %276
  %278 = vrot.lane.b32.xlu0 %v112, 19
  %v279 = vpop.permute.xlu0 %278
  %280 = vrot.lane.b32.xlu0 %v113, 19
  %v281 = vpop.permute.xlu0 %280
  %282 = vrot.lane.b32.xlu0 %v114, 19
  %v283 = vpop.permute.xlu0 %282
  %284 = vrot.lane.b32.xlu0 %v107, 19
  %v285 = vpop.permute.xlu0 %284
  %286 = vrot.lane.b32.xlu0 %v116, 19
  %v287 = vpop.permute.xlu0 %286
  %288 = vrot.lane.b32.xlu0 %v128, 19
  %v289 = vpop.permute.xlu0 %288
  %290 = vrot.lane.b32.xlu0 %v129, 19
  %v291 = vpop.permute.xlu0 %290
  %292 = vrot.lane.b32.xlu0 %v130, 19
  %v293 = vpop.permute.xlu0 %292
  %294 = vrot.lane.b32.xlu0 %v131, 19
  %v295 = vpop.permute.xlu0 %294
  %296 = vrot.lane.b32.xlu0 %v132, 19
  %v297 = vpop.permute.xlu0 %296
  %298 = vrot.lane.b32.xlu0 %v126, 19
  %v299 = vpop.permute.xlu0 %298
  %300 = vrot.lane.b32.xlu0 %v141, 19
  %v301 = vpop.permute.xlu0 %300
  %302 = vrot.lane.b32.xlu0 %v155, 19
  %v303 = vpop.permute.xlu0 %302
  %304 = vrot.lane.b32.xlu0 %v156, 19
  %v305 = vpop.permute.xlu0 %304
  %306 = vrot.lane.b32.xlu0 %v157, 19
  %v307 = vpop.permute.xlu0 %306
  %308 = vrot.lane.b32.xlu0 %v158, 19
  %v309 = vpop.permute.xlu0 %308
  %310 = vrot.lane.b32.xlu0 %v159, 19
  %v311 = vpop.permute.xlu0 %310
  %312 = vrot.lane.b32.xlu0 %v160, 19
  %v313 = vpop.permute.xlu0 %312
  %314 = vrot.lane.b32.xlu0 %v162, 19
  %v315 = vpop.permute.xlu0 %314
  %316 = vrot.lane.b32.xlu0 %v176, 19
  %v317 = vpop.permute.xlu0 %316
  %318 = vrot.lane.b32.xlu0 %v177, 19
  %v319 = vpop.permute.xlu0 %318
  %320 = vrot.lane.b32.xlu0 %v178, 19
  %v321 = vpop.permute.xlu0 %320
  %322 = vrot.lane.b32.xlu0 %v179, 19
  %v323 = vpop.permute.xlu0 %322
  %324 = vrot.lane.b32.xlu0 %v180, 19
  %v325 = vpop.permute.xlu0 %324
  %326 = vrot.lane.b32.xlu0 %v181, 19
  %v327 = vpop.permute.xlu0 %326
  %328 = vrot.lane.b32.xlu0 %v183, 19
  %v329 = vpop.permute.xlu0 %328
  %330 = vrot.lane.b32.xlu0 %v197, 19
  %v331 = vpop.permute.xlu0 %330
  %332 = vrot.lane.b32.xlu0 %v198, 19
  %v333 = vpop.permute.xlu0 %332
  %334 = vrot.lane.b32.xlu0 %v199, 19
  %v335 = vpop.permute.xlu0 %334
  %336 = vrot.lane.b32.xlu0 %v200, 19
  %v337 = vpop.permute.xlu0 %336
  %338 = vrot.lane.b32.xlu0 %v201, 19
  %v339 = vpop.permute.xlu0 %338
  %340 = vrot.lane.b32.xlu0 %v202, 19
  %v341 = vpop.permute.xlu0 %340
  %342 = vrot.lane.b32.xlu0 %v204, 19
  %v343 = vpop.permute.xlu0 %342
  %344 = vrot.lane.b32.xlu0 %v218, 19
  %v345 = vpop.permute.xlu0 %344
  %346 = vrot.lane.b32.xlu0 %v219, 19
  %v347 = vpop.permute.xlu0 %346
  %348 = vrot.lane.b32.xlu0 %v220, 19
  %v349 = vpop.permute.xlu0 %348
  %350 = vrot.lane.b32.xlu0 %v221, 19
  %v351 = vpop.permute.xlu0 %350
  %352 = vrot.lane.b32.xlu0 %v222, 19
  %v353 = vpop.permute.xlu0 %352
  %354 = vrot.lane.b32.xlu0 %v223, 19
  %v355 = vpop.permute.xlu0 %354
  %vm356 = vcmask 154624
  %v357 = vsel %vm356, %v231, %v233
  %v358 = vsel %vm356, %v233, %v235
  %v359 = vsel %vm356, %v235, %v237
  %v360 = vsel %vm356, %v237, %v239
  %v361 = vsel %vm356, %v239, %v241
  %v362 = vsel %vm356, %v241, %v243
  %v363 = vsel %vm356, %v245, %v247
  %v364 = vsel %vm356, %v247, %v249
  %v365 = vsel %vm356, %v249, %v251
  %v366 = vsel %vm356, %v251, %v253
  %v367 = vsel %vm356, %v253, %v255
  %v368 = vsel %vm356, %v255, %v257
  %v369 = vsel %vm356, %v259, %v261
  %v370 = vsel %vm356, %v261, %v263
  %v371 = vsel %vm356, %v263, %v265
  %v372 = vsel %vm356, %v265, %v267
  %v373 = vsel %vm356, %v267, %v269
  %v374 = vsel %vm356, %v269, %v271
  %v375 = vsel %vm356, %v273, %v275
  %v376 = vsel %vm356, %v275, %v277
  %v377 = vsel %vm356, %v277, %v279
  %v378 = vsel %vm356, %v279, %v281
  %v379 = vsel %vm356, %v281, %v283
  %v380 = vsel %vm356, %v283, %v285
  %v381 = vsel %vm356, %v287, %v289
  %v382 = vsel %vm356, %v289, %v291
  %v383 = vsel %vm356, %v291, %v293
  %v384 = vsel %vm356, %v293, %v295
  %v385 = vsel %vm356, %v295, %v297
  %v386 = vsel %vm356, %v297, %v299
  %v387 = vsel %vm356, %v301, %v303
  %v388 = vsel %vm356, %v303, %v305
  %v389 = vsel %vm356, %v305, %v307
  %v390 = vsel %vm356, %v307, %v309
  %v391 = vsel %vm356, %v309, %v311
  %v392 = vsel %vm356, %v311, %v313
  %v393 = vsel %vm356, %v315, %v317
  %v394 = vsel %vm356, %v317, %v319
  %v395 = vsel %vm356, %v319, %v321
  %v396 = vsel %vm356, %v321, %v323
  %v397 = vsel %vm356, %v323, %v325
  %v398 = vsel %vm356, %v325, %v327
  %v399 = vsel %vm356, %v329, %v331
  %v400 = vsel %vm356, %v331, %v333
  %v401 = vsel %vm356, %v333, %v335
  %v402 = vsel %vm356, %v335, %v337
  %v403 = vsel %vm356, %v337, %v339
  %v404 = vsel %vm356, %v339, %v341
  %v405 = vsel %vm356, %v343, %v345
  %v406 = vsel %vm356, %v345, %v347
  %v407 = vsel %vm356, %v347, %v349
  %v408 = vsel %vm356, %v349, %v351
  %v409 = vsel %vm356, %v351, %v353
  %v410 = vsel %vm356, %v353, %v355
  %vm465 = vcmask 588800
  %v466 = vsel %vm465, %v224, 0
  %468 = vmatpush.msra.mxu0 0.0
  %469 = vmatpush.msra.mxu0 0.0
  %470 = vmatpush.msra.mxu0 0.0
  %471 = vmatpush.msra.mxu0 0.0
  %472 = vmatpush.msra.mxu0 0.0
  %473 = vmatpush.msra.mxu0 0.0
  %474 = vmatpush.msra.mxu0 0.0
  %475 = vmatpush.msra.mxu0 %v405
  %476 = vmatpush.msra.mxu0 %v399
  %477 = vmatpush.msra.mxu0 %v393
  %478 = vmatpush.msra.mxu0 %v387
  %479 = vmatpush.msra.mxu0 %v381
  %480 = vmatpush.msra.mxu0 %v375
  %481 = vmatpush.msra.mxu0 %v369
  %482 = vmatpush.msra.mxu0 %v363
  %483 = vmatpush.msra.mxu0 %v357
  %484 = vmatmul.f32.gmra.mxu0 %v466
  %v485 = vpop.f32.mrf.mxu0
  %v486 = vadd.f32 %v228, %v485
  %487 = vdwg.mxu0
  %488 = vmatpush.msra.mxu0 0.0
  %489 = vmatpush.msra.mxu0 0.0
  %490 = vmatpush.msra.mxu0 0.0
  %491 = vmatpush.msra.mxu0 0.0
  %492 = vmatpush.msra.mxu0 0.0
  %493 = vmatpush.msra.mxu0 0.0
  %494 = vmatpush.msra.mxu0 0.0
  %495 = vmatpush.msra.mxu0 %v406
  %496 = vmatpush.msra.mxu0 %v400
  %497 = vmatpush.msra.mxu0 %v394
  %498 = vmatpush.msra.mxu0 %v388
  %499 = vmatpush.msra.mxu0 %v382
  %500 = vmatpush.msra.mxu0 %v376
  %501 = vmatpush.msra.mxu0 %v370
  %502 = vmatpush.msra.mxu0 %v364
  %503 = vmatpush.msra.mxu0 %v358
  %504 = vmatmul.f32.gmra.mxu0 %v466
  %v505 = vpop.f32.mrf.mxu0
  %v506 = vadd.f32 %v228, %v505
  %507 = vdwg.mxu0
  %508 = vmatpush.msra.mxu0 0.0
  %509 = vmatpush.msra.mxu0 0.0
  %510 = vmatpush.msra.mxu0 0.0
  %511 = vmatpush.msra.mxu0 0.0
  %512 = vmatpush.msra.mxu0 0.0
  %513 = vmatpush.msra.mxu0 0.0
  %514 = vmatpush.msra.mxu0 0.0
  %515 = vmatpush.msra.mxu0 %v407
  %516 = vmatpush.msra.mxu0 %v401
  %517 = vmatpush.msra.mxu0 %v395
  %518 = vmatpush.msra.mxu0 %v389
  %519 = vmatpush.msra.mxu0 %v383
  %520 = vmatpush.msra.mxu0 %v377
  %521 = vmatpush.msra.mxu0 %v371
  %522 = vmatpush.msra.mxu0 %v365
  %523 = vmatpush.msra.mxu0 %v359
  %524 = vmatmul.f32.gmra.mxu0 %v466
  %v525 = vpop.f32.mrf.mxu0
  %v526 = vadd.f32 %v228, %v525
  %527 = vdwg.mxu0
  %528 = vmatpush.msra.mxu0 0.0
  %529 = vmatpush.msra.mxu0 0.0
  %530 = vmatpush.msra.mxu0 0.0
  %531 = vmatpush.msra.mxu0 0.0
  %532 = vmatpush.msra.mxu0 0.0
  %533 = vmatpush.msra.mxu0 0.0
  %534 = vmatpush.msra.mxu0 0.0
  %535 = vmatpush.msra.mxu0 %v408
  %536 = vmatpush.msra.mxu0 %v402
  %537 = vmatpush.msra.mxu0 %v396
  %538 = vmatpush.msra.mxu0 %v390
  %539 = vmatpush.msra.mxu0 %v384
  %540 = vmatpush.msra.mxu0 %v378
  %541 = vmatpush.msra.mxu0 %v372
  %542 = vmatpush.msra.mxu0 %v366
  %543 = vmatpush.msra.mxu0 %v360
  %544 = vmatmul.f32.gmra.mxu0 %v466
  %v545 = vpop.f32.mrf.mxu0
  %v546 = vadd.f32 %v228, %v545
  %547 = vdwg.mxu0
  %548 = vmatpush.msra.mxu0 0.0
  %549 = vmatpush.msra.mxu0 0.0
  %550 = vmatpush.msra.mxu0 0.0
  %551 = vmatpush.msra.mxu0 0.0
  %552 = vmatpush.msra.mxu0 0.0
  %553 = vmatpush.msra.mxu0 0.0
  %554 = vmatpush.msra.mxu0 0.0
  %555 = vmatpush.msra.mxu0 %v409
  %556 = vmatpush.msra.mxu0 %v403
  %557 = vmatpush.msra.mxu0 %v397
  %558 = vmatpush.msra.mxu0 %v391
  %559 = vmatpush.msra.mxu0 %v385
  %560 = vmatpush.msra.mxu0 %v379
  %561 = vmatpush.msra.mxu0 %v373
  %562 = vmatpush.msra.mxu0 %v367
  %563 = vmatpush.msra.mxu0 %v361
  %564 = vmatmul.f32.gmra.mxu0 %v466
  %v565 = vpop.f32.mrf.mxu0
  %v566 = vadd.f32 %v228, %v565
  %567 = vdwg.mxu0
  %568 = vmatpush.msra.mxu0 0.0
  %569 = vmatpush.msra.mxu0 0.0
  %570 = vmatpush.msra.mxu0 0.0
  %571 = vmatpush.msra.mxu0 0.0
  %572 = vmatpush.msra.mxu0 0.0
  %573 = vmatpush.msra.mxu0 0.0
  %574 = vmatpush.msra.mxu0 0.0
  %575 = vmatpush.msra.mxu0 %v410
  %576 = vmatpush.msra.mxu0 %v404
  %577 = vmatpush.msra.mxu0 %v398
  %578 = vmatpush.msra.mxu0 %v392
  %579 = vmatpush.msra.mxu0 %v386
  %580 = vmatpush.msra.mxu0 %v380
  %581 = vmatpush.msra.mxu0 %v374
  %582 = vmatpush.msra.mxu0 %v368
  %583 = vmatpush.msra.mxu0 %v362
  %584 = vmatmul.f32.gmra.mxu0 %v466
  %v585 = vpop.f32.mrf.mxu0
  %v586 = vadd.f32 %v228, %v585
  %587 = vdwg.mxu0
  %v589 = vperm.slane %v30, 0
  %v590 = vperm.slane %v30, 1
  %v591 = vperm.slane %v30, 2
  %v592 = vperm.slane %v30, 3
  %v593 = vperm.slane %v30, 4
  %v594 = vperm.slane %v30, 5
  %v601 = vmul.f32 %v486, %v589
  %v602 = vmul.f32 %v506, %v590
  %v603 = vmul.f32 %v526, %v591
  %v604 = vmul.f32 %v546, %v592
  %v605 = vmul.f32 %v566, %v593
  %v606 = vmul.f32 %v586, %v594
  %607 = vst [vmem:[#allocation2 + $0x8] sm:$0xff] %v601
  %608 = vst [vmem:[#allocation2 + $0x10] sm:$0xff] %v602
  %609 = vst [vmem:[#allocation2 + $0x18] sm:$0xff] %v603
  %610 = vst [vmem:[#allocation2 + $0x20] sm:$0xff] %v604
  %611 = vst [vmem:[#allocation2 + $0x28] sm:$0xff] %v605
  %612 = vst [vmem:[#allocation2 + $0x30] sm:$0xff] %v606
  %v613 = vld [vmem:[#allocation2] sm:$0xff]
  %v614 = vld [vmem:[#allocation2 + $0x8] sm:$0xff]
  %v615 = vld [vmem:[#allocation2 + $0x10] sm:$0xff]
  %v616 = vld [vmem:[#allocation2 + $0x18] sm:$0xff]
  %v617 = vld [vmem:[#allocation2 + $0x20] sm:$0xff]
  %v618 = vld [vmem:[#allocation2 + $0x28] sm:$0xff]
  %v619 = vld [vmem:[#allocation2 + $0x30] sm:$0xff]
  %v620 = vld [vmem:[#allocation2 + $0x8] sm:$0xff]
  %v621 = vld [vmem:[#allocation2 + $0x10] sm:$0xff]
  %v622 = vld [vmem:[#allocation2 + $0x18] sm:$0xff]
  %v623 = vld [vmem:[#allocation2 + $0x20] sm:$0xff]
  %v624 = vld [vmem:[#allocation2 + $0x28] sm:$0xff]
  %v625 = vld [vmem:[#allocation2 + $0x30] sm:$0xff]
  %v626 = vld [vmem:[#allocation2 + $0x38] sm:$0xff]
  %634 = vrot.lane.b32.xlu0 %v613, 127
  %v635 = vpop.permute.xlu0 %634
  %636 = vrot.lane.b32.xlu0 %v614, 127
  %v637 = vpop.permute.xlu0 %636
  %638 = vrot.lane.b32.xlu0 %v615, 127
  %v639 = vpop.permute.xlu0 %638
  %640 = vrot.lane.b32.xlu0 %v616, 127
  %v641 = vpop.permute.xlu0 %640
  %642 = vrot.lane.b32.xlu0 %v617, 127
  %v643 = vpop.permute.xlu0 %642
  %644 = vrot.lane.b32.xlu0 %v618, 127
  %v645 = vpop.permute.xlu0 %644
  %646 = vrot.lane.b32.xlu0 %v619, 127
  %v647 = vpop.permute.xlu0 %646
  %v648 = vsel %vm66, %v635, %v637
  %v649 = vsel %vm66, %v637, %v639
  %v650 = vsel %vm66, %v639, %v641
  %v651 = vsel %vm66, %v641, %v643
  %v652 = vsel %vm66, %v643, %v645
  %v653 = vsel %vm66, %v645, %v647
  %654 = vrot.lane.b32.xlu0 %v613, 126
  %v655 = vpop.permute.xlu0 %654
  %656 = vrot.lane.b32.xlu0 %v614, 126
  %v657 = vpop.permute.xlu0 %656
  %658 = vrot.lane.b32.xlu0 %v615, 126
  %v659 = vpop.permute.xlu0 %658
  %660 = vrot.lane.b32.xlu0 %v616, 126
  %v661 = vpop.permute.xlu0 %660
  %662 = vrot.lane.b32.xlu0 %v617, 126
  %v663 = vpop.permute.xlu0 %662
  %664 = vrot.lane.b32.xlu0 %v618, 126
  %v665 = vpop.permute.xlu0 %664
  %666 = vrot.lane.b32.xlu0 %v619, 126
  %v667 = vpop.permute.xlu0 %666
  %v668 = vsel %vm87, %v655, %v657
  %v669 = vsel %vm87, %v657, %v659
  %v670 = vsel %vm87, %v659, %v661
  %v671 = vsel %vm87, %v661, %v663
  %v672 = vsel %vm87, %v663, %v665
  %v673 = vsel %vm87, %v665, %v667
  %674 = vrot.lane.b32.xlu0 %v613, 110
  %v675 = vpop.permute.xlu0 %674
  %676 = vrot.lane.b32.xlu0 %v614, 110
  %v677 = vpop.permute.xlu0 %676
  %678 = vrot.lane.b32.xlu0 %v615, 110
  %v679 = vpop.permute.xlu0 %678
  %680 = vrot.lane.b32.xlu0 %v616, 110
  %v681 = vpop.permute.xlu0 %680
  %682 = vrot.lane.b32.xlu0 %v617, 110
  %v683 = vpop.permute.xlu0 %682
  %684 = vrot.lane.b32.xlu0 %v618, 110
  %v685 = vpop.permute.xlu0 %684
  %686 = vrot.lane.b32.xlu0 %v619, 110
  %v687 = vpop.permute.xlu0 %686
  %v688 = vsel %vm108, %v675, %v677
  %v689 = vsel %vm108, %v677, %v679
  %v690 = vsel %vm108, %v679, %v681
  %v691 = vsel %vm108, %v681, %v683
  %v692 = vsel %vm108, %v683, %v685
  %v693 = vsel %vm108, %v685, %v687
  %694 = vrot.lane.b32.xlu0 %v614, 109
  %v695 = vpop.permute.xlu0 %694
  %696 = vrot.lane.b32.xlu0 %v615, 109
  %v697 = vpop.permute.xlu0 %696
  %698 = vrot.lane.b32.xlu0 %v616, 109
  %v699 = vpop.permute.xlu0 %698
  %700 = vrot.lane.b32.xlu0 %v617, 109
  %v701 = vpop.permute.xlu0 %700
  %702 = vrot.lane.b32.xlu0 %v618, 109
  %v703 = vpop.permute.xlu0 %702
  %704 = vrot.lane.b32.xlu0 %v619, 109
  %v705 = vpop.permute.xlu0 %704
  %v706 = vsel %vm127, %v695, %v697
  %v707 = vsel %vm127, %v697, %v699
  %v708 = vsel %vm127, %v699, %v701
  %v709 = vsel %vm127, %v701, %v703
  %v710 = vsel %vm127, %v703, %v705
  %718 = vrot.lane.b32.xlu0 %v620, 108
  %v719 = vpop.permute.xlu0 %718
  %720 = vrot.lane.b32.xlu0 %v621, 108
  %v721 = vpop.permute.xlu0 %720
  %722 = vrot.lane.b32.xlu0 %v622, 108
  %v723 = vpop.permute.xlu0 %722
  %724 = vrot.lane.b32.xlu0 %v623, 108
  %v725 = vpop.permute.xlu0 %724
  %726 = vrot.lane.b32.xlu0 %v624, 108
  %v727 = vpop.permute.xlu0 %726
  %728 = vrot.lane.b32.xlu0 %v625, 108
  %v729 = vpop.permute.xlu0 %728
  %730 = vrot.lane.b32.xlu0 %v626, 108
  %v731 = vpop.permute.xlu0 %730
  %v732 = vsel %vm154, %v719, %v721
  %v733 = vsel %vm154, %v721, %v723
  %v734 = vsel %vm154, %v723, %v725
  %v735 = vsel %vm154, %v725, %v727
  %v736 = vsel %vm154, %v727, %v729
  %v737 = vsel %vm154, %v729, %v731
  %738 = vrot.lane.b32.xlu0 %v620, 92
  %v739 = vpop.permute.xlu0 %738
  %740 = vrot.lane.b32.xlu0 %v621, 92
  %v741 = vpop.permute.xlu0 %740
  %742 = vrot.lane.b32.xlu0 %v622, 92
  %v743 = vpop.permute.xlu0 %742
  %744 = vrot.lane.b32.xlu0 %v623, 92
  %v745 = vpop.permute.xlu0 %744
  %746 = vrot.lane.b32.xlu0 %v624, 92
  %v747 = vpop.permute.xlu0 %746
  %748 = vrot.lane.b32.xlu0 %v625, 92
  %v749 = vpop.permute.xlu0 %748
  %750 = vrot.lane.b32.xlu0 %v626, 92
  %v751 = vpop.permute.xlu0 %750
  %v752 = vsel %vm175, %v739, %v741
  %v753 = vsel %vm175, %v741, %v743
  %v754 = vsel %vm175, %v743, %v745
  %v755 = vsel %vm175, %v745, %v747
  %v756 = vsel %vm175, %v747, %v749
  %v757 = vsel %vm175, %v749, %v751
  %758 = vrot.lane.b32.xlu0 %v620, 91
  %v759 = vpop.permute.xlu0 %758
  %760 = vrot.lane.b32.xlu0 %v621, 91
  %v761 = vpop.permute.xlu0 %760
  %762 = vrot.lane.b32.xlu0 %v622, 91
  %v763 = vpop.permute.xlu0 %762
  %764 = vrot.lane.b32.xlu0 %v623, 91
  %v765 = vpop.permute.xlu0 %764
  %766 = vrot.lane.b32.xlu0 %v624, 91
  %v767 = vpop.permute.xlu0 %766
  %768 = vrot.lane.b32.xlu0 %v625, 91
  %v769 = vpop.permute.xlu0 %768
  %770 = vrot.lane.b32.xlu0 %v626, 91
  %v771 = vpop.permute.xlu0 %770
  %v772 = vsel %vm196, %v759, %v761
  %v773 = vsel %vm196, %v761, %v763
  %v774 = vsel %vm196, %v763, %v765
  %v775 = vsel %vm196, %v765, %v767
  %v776 = vsel %vm196, %v767, %v769
  %v777 = vsel %vm196, %v769, %v771
  %778 = vrot.lane.b32.xlu0 %v620, 90
  %v779 = vpop.permute.xlu0 %778
  %780 = vrot.lane.b32.xlu0 %v621, 90
  %v781 = vpop.permute.xlu0 %780
  %782 = vrot.lane.b32.xlu0 %v622, 90
  %v783 = vpop.permute.xlu0 %782
  %784 = vrot.lane.b32.xlu0 %v623, 90
  %v785 = vpop.permute.xlu0 %784
  %786 = vrot.lane.b32.xlu0 %v624, 90
  %v787 = vpop.permute.xlu0 %786
  %788 = vrot.lane.b32.xlu0 %v625, 90
  %v789 = vpop.permute.xlu0 %788
  %790 = vrot.lane.b32.xlu0 %v626, 90
  %v791 = vpop.permute.xlu0 %790
  %v792 = vsel %vm217, %v779, %v781
  %v793 = vsel %vm217, %v781, %v783
  %v794 = vsel %vm217, %v783, %v785
  %v795 = vsel %vm217, %v785, %v787
  %v796 = vsel %vm217, %v787, %v789
  %v797 = vsel %vm217, %v789, %v791
  %s798 = scalar_lea.vmem %s2, 8
  %v799 = vld [vmem:[%s798] sm:$0xff]
  %801 = vset.pattern.permute.xlu0 72
  %802 = vperm.xlu0 %801, %v799
  %v803 = vpop.permute.xlu0 %802
  %805 = vrot.lane.b32.xlu0 %v613, 19
  %v806 = vpop.permute.xlu0 %805
  %807 = vrot.lane.b32.xlu0 %v614, 19
  %v808 = vpop.permute.xlu0 %807
  %809 = vrot.lane.b32.xlu0 %v615, 19
  %v810 = vpop.permute.xlu0 %809
  %811 = vrot.lane.b32.xlu0 %v616, 19
  %v812 = vpop.permute.xlu0 %811
  %813 = vrot.lane.b32.xlu0 %v617, 19
  %v814 = vpop.permute.xlu0 %813
  %815 = vrot.lane.b32.xlu0 %v618, 19
  %v816 = vpop.permute.xlu0 %815
  %817 = vrot.lane.b32.xlu0 %v619, 19
  %v818 = vpop.permute.xlu0 %817
  %819 = vrot.lane.b32.xlu0 %v648, 19
  %v820 = vpop.permute.xlu0 %819
  %821 = vrot.lane.b32.xlu0 %v649, 19
  %v822 = vpop.permute.xlu0 %821
  %823 = vrot.lane.b32.xlu0 %v650, 19
  %v824 = vpop.permute.xlu0 %823
  %825 = vrot.lane.b32.xlu0 %v651, 19
  %v826 = vpop.permute.xlu0 %825
  %827 = vrot.lane.b32.xlu0 %v652, 19
  %v828 = vpop.permute.xlu0 %827
  %829 = vrot.lane.b32.xlu0 %v653, 19
  %v830 = vpop.permute.xlu0 %829
  %831 = vrot.lane.b32.xlu0 %v647, 19
  %v832 = vpop.permute.xlu0 %831
  %833 = vrot.lane.b32.xlu0 %v668, 19
  %v834 = vpop.permute.xlu0 %833
  %835 = vrot.lane.b32.xlu0 %v669, 19
  %v836 = vpop.permute.xlu0 %835
  %837 = vrot.lane.b32.xlu0 %v670, 19
  %v838 = vpop.permute.xlu0 %837
  %839 = vrot.lane.b32.xlu0 %v671, 19
  %v840 = vpop.permute.xlu0 %839
  %841 = vrot.lane.b32.xlu0 %v672, 19
  %v842 = vpop.permute.xlu0 %841
  %843 = vrot.lane.b32.xlu0 %v673, 19
  %v844 = vpop.permute.xlu0 %843
  %845 = vrot.lane.b32.xlu0 %v667, 19
  %v846 = vpop.permute.xlu0 %845
  %847 = vrot.lane.b32.xlu0 %v688, 19
  %v848 = vpop.permute.xlu0 %847
  %849 = vrot.lane.b32.xlu0 %v689, 19
  %v850 = vpop.permute.xlu0 %849
  %851 = vrot.lane.b32.xlu0 %v690, 19
  %v852 = vpop.permute.xlu0 %851
  %853 = vrot.lane.b32.xlu0 %v691, 19
  %v854 = vpop.permute.xlu0 %853
  %855 = vrot.lane.b32.xlu0 %v692, 19
  %v856 = vpop.permute.xlu0 %855
  %857 = vrot.lane.b32.xlu0 %v693, 19
  %v858 = vpop.permute.xlu0 %857
  %859 = vrot.lane.b32.xlu0 %v687, 19
  %v860 = vpop.permute.xlu0 %859
  %861 = vrot.lane.b32.xlu0 %v695, 19
  %v862 = vpop.permute.xlu0 %861
  %863 = vrot.lane.b32.xlu0 %v706, 19
  %v864 = vpop.permute.xlu0 %863
  %865 = vrot.lane.b32.xlu0 %v707, 19
  %v866 = vpop.permute.xlu0 %865
  %867 = vrot.lane.b32.xlu0 %v708, 19
  %v868 = vpop.permute.xlu0 %867
  %869 = vrot.lane.b32.xlu0 %v709, 19
  %v870 = vpop.permute.xlu0 %869
  %871 = vrot.lane.b32.xlu0 %v710, 19
  %v872 = vpop.permute.xlu0 %871
  %873 = vrot.lane.b32.xlu0 %v705, 19
  %v874 = vpop.permute.xlu0 %873
  %875 = vrot.lane.b32.xlu0 %v719, 19
  %v876 = vpop.permute.xlu0 %875
  %877 = vrot.lane.b32.xlu0 %v732, 19
  %v878 = vpop.permute.xlu0 %877
  %879 = vrot.lane.b32.xlu0 %v733, 19
  %v880 = vpop.permute.xlu0 %879
  %881 = vrot.lane.b32.xlu0 %v734, 19
  %v882 = vpop.permute.xlu0 %881
  %883 = vrot.lane.b32.xlu0 %v735, 19
  %v884 = vpop.permute.xlu0 %883
  %885 = vrot.lane.b32.xlu0 %v736, 19
  %v886 = vpop.permute.xlu0 %885
  %887 = vrot.lane.b32.xlu0 %v737, 19
  %v888 = vpop.permute.xlu0 %887
  %889 = vrot.lane.b32.xlu0 %v739, 19
  %v890 = vpop.permute.xlu0 %889
  %891 = vrot.lane.b32.xlu0 %v752, 19
  %v892 = vpop.permute.xlu0 %891
  %893 = vrot.lane.b32.xlu0 %v753, 19
  %v894 = vpop.permute.xlu0 %893
  %895 = vrot.lane.b32.xlu0 %v754, 19
  %v896 = vpop.permute.xlu0 %895
  %897 = vrot.lane.b32.xlu0 %v755, 19
  %v898 = vpop.permute.xlu0 %897
  %899 = vrot.lane.b32.xlu0 %v756, 19
  %v900 = vpop.permute.xlu0 %899
  %901 = vrot.lane.b32.xlu0 %v757, 19
  %v902 = vpop.permute.xlu0 %901
  %903 = vrot.lane.b32.xlu0 %v759, 19
  %v904 = vpop.permute.xlu0 %903
  %905 = vrot.lane.b32.xlu0 %v772, 19
  %v906 = vpop.permute.xlu0 %905
  %907 = vrot.lane.b32.xlu0 %v773, 19
  %v908 = vpop.permute.xlu0 %907
  %909 = vrot.lane.b32.xlu0 %v774, 19
  %v910 = vpop.permute.xlu0 %909
  %911 = vrot.lane.b32.xlu0 %v775, 19
  %v912 = vpop.permute.xlu0 %911
  %913 = vrot.lane.b32.xlu0 %v776, 19
  %v914 = vpop.permute.xlu0 %913
  %915 = vrot.lane.b32.xlu0 %v777, 19
  %v916 = vpop.permute.xlu0 %915
  %917 = vrot.lane.b32.xlu0 %v779, 19
  %v918 = vpop.permute.xlu0 %917
  %919 = vrot.lane.b32.xlu0 %v792, 19
  %v920 = vpop.permute.xlu0 %919
  %921 = vrot.lane.b32.xlu0 %v793, 19
  %v922 = vpop.permute.xlu0 %921
  %923 = vrot.lane.b32.xlu0 %v794, 19
  %v924 = vpop.permute.xlu0 %923
  %925 = vrot.lane.b32.xlu0 %v795, 19
  %v926 = vpop.permute.xlu0 %925
  %927 = vrot.lane.b32.xlu0 %v796, 19
  %v928 = vpop.permute.xlu0 %927
  %929 = vrot.lane.b32.xlu0 %v797, 19
  %v930 = vpop.permute.xlu0 %929
  %v931 = vsel %vm356, %v806, %v808
  %v932 = vsel %vm356, %v808, %v810
  %v933 = vsel %vm356, %v810, %v812
  %v934 = vsel %vm356, %v812, %v814
  %v935 = vsel %vm356, %v814, %v816
  %v936 = vsel %vm356, %v816, %v818
  %v937 = vsel %vm356, %v820, %v822
  %v938 = vsel %vm356, %v822, %v824
  %v939 = vsel %vm356, %v824, %v826
  %v940 = vsel %vm356, %v826, %v828
  %v941 = vsel %vm356, %v828, %v830
  %v942 = vsel %vm356, %v830, %v832
  %v943 = vsel %vm356, %v834, %v836
  %v944 = vsel %vm356, %v836, %v838
  %v945 = vsel %vm356, %v838, %v840
  %v946 = vsel %vm356, %v840, %v842
  %v947 = vsel %vm356, %v842, %v844
  %v948 = vsel %vm356, %v844, %v846
  %v949 = vsel %vm356, %v848, %v850
  %v950 = vsel %vm356, %v850, %v852
  %v951 = vsel %vm356, %v852, %v854
  %v952 = vsel %vm356, %v854, %v856
  %v953 = vsel %vm356, %v856, %v858
  %v954 = vsel %vm356, %v858, %v860
  %v955 = vsel %vm356, %v862, %v864
  %v956 = vsel %vm356, %v864, %v866
  %v957 = vsel %vm356, %v866, %v868
  %v958 = vsel %vm356, %v868, %v870
  %v959 = vsel %vm356, %v870, %v872
  %v960 = vsel %vm356, %v872, %v874
  %v961 = vsel %vm356, %v876, %v878
  %v962 = vsel %vm356, %v878, %v880
  %v963 = vsel %vm356, %v880, %v882
  %v964 = vsel %vm356, %v882, %v884
  %v965 = vsel %vm356, %v884, %v886
  %v966 = vsel %vm356, %v886, %v888
  %v967 = vsel %vm356, %v890, %v892
  %v968 = vsel %vm356, %v892, %v894
  %v969 = vsel %vm356, %v894, %v896
  %v970 = vsel %vm356, %v896, %v898
  %v971 = vsel %vm356, %v898, %v900
  %v972 = vsel %vm356, %v900, %v902
  %v973 = vsel %vm356, %v904, %v906
  %v974 = vsel %vm356, %v906, %v908
  %v975 = vsel %vm356, %v908, %v910
  %v976 = vsel %vm356, %v910, %v912
  %v977 = vsel %vm356, %v912, %v914
  %v978 = vsel %vm356, %v914, %v916
  %v979 = vsel %vm356, %v918, %v920
  %v980 = vsel %vm356, %v920, %v922
  %v981 = vsel %vm356, %v922, %v924
  %v982 = vsel %vm356, %v924, %v926
  %v983 = vsel %vm356, %v926, %v928
  %v984 = vsel %vm356, %v928, %v930
  %v1039 = vsel %vm465, %v799, 0
  %1041 = vmatpush.msra.mxu0 0.0
  %1042 = vmatpush.msra.mxu0 0.0
  %1043 = vmatpush.msra.mxu0 0.0
  %1044 = vmatpush.msra.mxu0 0.0
  %1045 = vmatpush.msra.mxu0 0.0
  %1046 = vmatpush.msra.mxu0 0.0
  %1047 = vmatpush.msra.mxu0 0.0
  %1048 = vmatpush.msra.mxu0 %v979
  %1049 = vmatpush.msra.mxu0 %v973
  %1050 = vmatpush.msra.mxu0 %v967
  %1051 = vmatpush.msra.mxu0 %v961
  %1052 = vmatpush.msra.mxu0 %v955
  %1053 = vmatpush.msra.mxu0 %v949
  %1054 = vmatpush.msra.mxu0 %v943
  %1055 = vmatpush.msra.mxu0 %v937
  %1056 = vmatpush.msra.mxu0 %v931
  %1057 = vmatmul.f32.gmra.mxu0 %v1039
  %v1058 = vpop.f32.mrf.mxu0
  %v1059 = vadd.f32 %v803, %v1058
  %1060 = vdwg.mxu0
  %1061 = vmatpush.msra.mxu0 0.0
  %1062 = vmatpush.msra.mxu0 0.0
  %1063 = vmatpush.msra.mxu0 0.0
  %1064 = vmatpush.msra.mxu0 0.0
  %1065 = vmatpush.msra.mxu0 0.0
  %1066 = vmatpush.msra.mxu0 0.0
  %1067 = vmatpush.msra.mxu0 0.0
  %1068 = vmatpush.msra.mxu0 %v980
  %1069 = vmatpush.msra.mxu0 %v974
  %1070 = vmatpush.msra.mxu0 %v968
  %1071 = vmatpush.msra.mxu0 %v962
  %1072 = vmatpush.msra.mxu0 %v956
  %1073 = vmatpush.msra.mxu0 %v950
  %1074 = vmatpush.msra.mxu0 %v944
  %1075 = vmatpush.msra.mxu0 %v938
  %1076 = vmatpush.msra.mxu0 %v932
  %1077 = vmatmul.f32.gmra.mxu0 %v1039
  %v1078 = vpop.f32.mrf.mxu0
  %v1079 = vadd.f32 %v803, %v1078
  %1080 = vdwg.mxu0
  %1081 = vmatpush.msra.mxu0 0.0
  %1082 = vmatpush.msra.mxu0 0.0
  %1083 = vmatpush.msra.mxu0 0.0
  %1084 = vmatpush.msra.mxu0 0.0
  %1085 = vmatpush.msra.mxu0 0.0
  %1086 = vmatpush.msra.mxu0 0.0
  %1087 = vmatpush.msra.mxu0 0.0
  %1088 = vmatpush.msra.mxu0 %v981
  %1089 = vmatpush.msra.mxu0 %v975
  %1090 = vmatpush.msra.mxu0 %v969
  %1091 = vmatpush.msra.mxu0 %v963
  %1092 = vmatpush.msra.mxu0 %v957
  %1093 = vmatpush.msra.mxu0 %v951
  %1094 = vmatpush.msra.mxu0 %v945
  %1095 = vmatpush.msra.mxu0 %v939
  %1096 = vmatpush.msra.mxu0 %v933
  %1097 = vmatmul.f32.gmra.mxu0 %v1039
  %v1098 = vpop.f32.mrf.mxu0
  %v1099 = vadd.f32 %v803, %v1098
  %1100 = vdwg.mxu0
  %1101 = vmatpush.msra.mxu0 0.0
  %1102 = vmatpush.msra.mxu0 0.0
  %1103 = vmatpush.msra.mxu0 0.0
  %1104 = vmatpush.msra.mxu0 0.0
  %1105 = vmatpush.msra.mxu0 0.0
  %1106 = vmatpush.msra.mxu0 0.0
  %1107 = vmatpush.msra.mxu0 0.0
  %1108 = vmatpush.msra.mxu0 %v982
  %1109 = vmatpush.msra.mxu0 %v976
  %1110 = vmatpush.msra.mxu0 %v970
  %1111 = vmatpush.msra.mxu0 %v964
  %1112 = vmatpush.msra.mxu0 %v958
  %1113 = vmatpush.msra.mxu0 %v952
  %1114 = vmatpush.msra.mxu0 %v946
  %1115 = vmatpush.msra.mxu0 %v940
  %1116 = vmatpush.msra.mxu0 %v934
  %1117 = vmatmul.f32.gmra.mxu0 %v1039
  %v1118 = vpop.f32.mrf.mxu0
  %v1119 = vadd.f32 %v803, %v1118
  %1120 = vdwg.mxu0
  %1121 = vmatpush.msra.mxu0 0.0
  %1122 = vmatpush.msra.mxu0 0.0
  %1123 = vmatpush.msra.mxu0 0.0
  %1124 = vmatpush.msra.mxu0 0.0
  %1125 = vmatpush.msra.mxu0 0.0
  %1126 = vmatpush.msra.mxu0 0.0
  %1127 = vmatpush.msra.mxu0 0.0
  %1128 = vmatpush.msra.mxu0 %v983
  %1129 = vmatpush.msra.mxu0 %v977
  %1130 = vmatpush.msra.mxu0 %v971
  %1131 = vmatpush.msra.mxu0 %v965
  %1132 = vmatpush.msra.mxu0 %v959
  %1133 = vmatpush.msra.mxu0 %v953
  %1134 = vmatpush.msra.mxu0 %v947
  %1135 = vmatpush.msra.mxu0 %v941
  %1136 = vmatpush.msra.mxu0 %v935
  %1137 = vmatmul.f32.gmra.mxu0 %v1039
  %v1138 = vpop.f32.mrf.mxu0
  %v1139 = vadd.f32 %v803, %v1138
  %1140 = vdwg.mxu0
  %1141 = vmatpush.msra.mxu0 0.0
  %1142 = vmatpush.msra.mxu0 0.0
  %1143 = vmatpush.msra.mxu0 0.0
  %1144 = vmatpush.msra.mxu0 0.0
  %1145 = vmatpush.msra.mxu0 0.0
  %1146 = vmatpush.msra.mxu0 0.0
  %1147 = vmatpush.msra.mxu0 0.0
  %1148 = vmatpush.msra.mxu0 %v984
  %1149 = vmatpush.msra.mxu0 %v978
  %1150 = vmatpush.msra.mxu0 %v972
  %1151 = vmatpush.msra.mxu0 %v966
  %1152 = vmatpush.msra.mxu0 %v960
  %1153 = vmatpush.msra.mxu0 %v954
  %1154 = vmatpush.msra.mxu0 %v948
  %1155 = vmatpush.msra.mxu0 %v942
  %1156 = vmatpush.msra.mxu0 %v936
  %1157 = vmatmul.f32.gmra.mxu0 %v1039
  %v1158 = vpop.f32.mrf.mxu0
  %v1159 = vadd.f32 %v803, %v1158
  %1160 = vdwg.mxu0
  %v1161 = vmul.f32 %v1059, %v589
  %v1162 = vmul.f32 %v1079, %v590
  %v1163 = vmul.f32 %v1099, %v591
  %v1164 = vmul.f32 %v1119, %v592
  %v1165 = vmul.f32 %v1139, %v593
  %v1166 = vmul.f32 %v1159, %v594
  %1167 = vst [vmem:[#allocation2 + $0x8] sm:$0xff] %v1161
  %1168 = vst [vmem:[#allocation2 + $0x10] sm:$0xff] %v1162
  %1169 = vst [vmem:[#allocation2 + $0x18] sm:$0xff] %v1163
  %1170 = vst [vmem:[#allocation2 + $0x20] sm:$0xff] %v1164
  %1171 = vst [vmem:[#allocation2 + $0x28] sm:$0xff] %v1165
  %1172 = vst [vmem:[#allocation2 + $0x30] sm:$0xff] %v1166
  %v1173 = vld [vmem:[#allocation2] sm:$0xff]
  %v1174 = vld [vmem:[#allocation2 + $0x8] sm:$0xff]
  %v1175 = vld [vmem:[#allocation2 + $0x10] sm:$0xff]
  %v1176 = vld [vmem:[#allocation2 + $0x18] sm:$0xff]
  %v1177 = vld [vmem:[#allocation2 + $0x20] sm:$0xff]
  %v1178 = vld [vmem:[#allocation2 + $0x28] sm:$0xff]
  %v1179 = vld [vmem:[#allocation2 + $0x30] sm:$0xff]
  %v1180 = vld [vmem:[#allocation2 + $0x8] sm:$0xff]
  %v1181 = vld [vmem:[#allocation2 + $0x10] sm:$0xff]
  %v1182 = vld [vmem:[#allocation2 + $0x18] sm:$0xff]
  %v1183 = vld [vmem:[#allocation2 + $0x20] sm:$0xff]
  %v1184 = vld [vmem:[#allocation2 + $0x28] sm:$0xff]
  %v1185 = vld [vmem:[#allocation2 + $0x30] sm:$0xff]
  %v1186 = vld [vmem:[#allocation2 + $0x38] sm:$0xff]
  %1194 = vrot.lane.b32.xlu0 %v1173, 127
  %v1195 = vpop.permute.xlu0 %1194
  %1196 = vrot.lane.b32.xlu0 %v1174, 127
  %v1197 = vpop.permute.xlu0 %1196
  %1198 = vrot.lane.b32.xlu0 %v1175, 127
  %v1199 = vpop.permute.xlu0 %1198
  %1200 = vrot.lane.b32.xlu0 %v1176, 127
  %v1201 = vpop.permute.xlu0 %1200
  %1202 = vrot.lane.b32.xlu0 %v1177, 127
  %v1203 = vpop.permute.xlu0 %1202
  %1204 = vrot.lane.b32.xlu0 %v1178, 127
  %v1205 = vpop.permute.xlu0 %1204
  %1206 = vrot.lane.b32.xlu0 %v1179, 127
  %v1207 = vpop.permute.xlu0 %1206
  %v1208 = vsel %vm66, %v1195, %v1197
  %v1209 = vsel %vm66, %v1197, %v1199
  %v1210 = vsel %vm66, %v1199, %v1201
  %v1211 = vsel %vm66, %v1201, %v1203
  %v1212 = vsel %vm66, %v1203, %v1205
  %v1213 = vsel %vm66, %v1205, %v1207
  %1214 = vrot.lane.b32.xlu0 %v1173, 126
  %v1215 = vpop.permute.xlu0 %1214
  %1216 = vrot.lane.b32.xlu0 %v1174, 126
  %v1217 = vpop.permute.xlu0 %1216
  %1218 = vrot.lane.b32.xlu0 %v1175, 126
  %v1219 = vpop.permute.xlu0 %1218
  %1220 = vrot.lane.b32.xlu0 %v1176, 126
  %v1221 = vpop.permute.xlu0 %1220
  %1222 = vrot.lane.b32.xlu0 %v1177, 126
  %v1223 = vpop.permute.xlu0 %1222
  %1224 = vrot.lane.b32.xlu0 %v1178, 126
  %v1225 = vpop.permute.xlu0 %1224
  %1226 = vrot.lane.b32.xlu0 %v1179, 126
  %v1227 = vpop.permute.xlu0 %1226
  %v1228 = vsel %vm87, %v1215, %v1217
  %v1229 = vsel %vm87, %v1217, %v1219
  %v1230 = vsel %vm87, %v1219, %v1221
  %v1231 = vsel %vm87, %v1221, %v1223
  %v1232 = vsel %vm87, %v1223, %v1225
  %v1233 = vsel %vm87, %v1225, %v1227
  %1234 = vrot.lane.b32.xlu0 %v1173, 110
  %v1235 = vpop.permute.xlu0 %1234
  %1236 = vrot.lane.b32.xlu0 %v1174, 110
  %v1237 = vpop.permute.xlu0 %1236
  %1238 = vrot.lane.b32.xlu0 %v1175, 110
  %v1239 = vpop.permute.xlu0 %1238
  %1240 = vrot.lane.b32.xlu0 %v1176, 110
  %v1241 = vpop.permute.xlu0 %1240
  %1242 = vrot.lane.b32.xlu0 %v1177, 110
  %v1243 = vpop.permute.xlu0 %1242
  %1244 = vrot.lane.b32.xlu0 %v1178, 110
  %v1245 = vpop.permute.xlu0 %1244
  %1246 = vrot.lane.b32.xlu0 %v1179, 110
  %v1247 = vpop.permute.xlu0 %1246
  %v1248 = vsel %vm108, %v1235, %v1237
  %v1249 = vsel %vm108, %v1237, %v1239
  %v1250 = vsel %vm108, %v1239, %v1241
  %v1251 = vsel %vm108, %v1241, %v1243
  %v1252 = vsel %vm108, %v1243, %v1245
  %v1253 = vsel %vm108, %v1245, %v1247
  %1254 = vrot.lane.b32.xlu0 %v1174, 109
  %v1255 = vpop.permute.xlu0 %1254
  %1256 = vrot.lane.b32.xlu0 %v1175, 109
  %v1257 = vpop.permute.xlu0 %1256
  %1258 = vrot.lane.b32.xlu0 %v1176, 109
  %v1259 = vpop.permute.xlu0 %1258
  %1260 = vrot.lane.b32.xlu0 %v1177, 109
  %v1261 = vpop.permute.xlu0 %1260
  %1262 = vrot.lane.b32.xlu0 %v1178, 109
  %v1263 = vpop.permute.xlu0 %1262
  %1264 = vrot.lane.b32.xlu0 %v1179, 109
  %v1265 = vpop.permute.xlu0 %1264
  %v1266 = vsel %vm127, %v1255, %v1257
  %v1267 = vsel %vm127, %v1257, %v1259
  %v1268 = vsel %vm127, %v1259, %v1261
  %v1269 = vsel %vm127, %v1261, %v1263
  %v1270 = vsel %vm127, %v1263, %v1265
  %1278 = vrot.lane.b32.xlu0 %v1180, 108
  %v1279 = vpop.permute.xlu0 %1278
  %1280 = vrot.lane.b32.xlu0 %v1181, 108
  %v1281 = vpop.permute.xlu0 %1280
  %1282 = vrot.lane.b32.xlu0 %v1182, 108
  %v1283 = vpop.permute.xlu0 %1282
  %1284 = vrot.lane.b32.xlu0 %v1183, 108
  %v1285 = vpop.permute.xlu0 %1284
  %1286 = vrot.lane.b32.xlu0 %v1184, 108
  %v1287 = vpop.permute.xlu0 %1286
  %1288 = vrot.lane.b32.xlu0 %v1185, 108
  %v1289 = vpop.permute.xlu0 %1288
  %1290 = vrot.lane.b32.xlu0 %v1186, 108
  %v1291 = vpop.permute.xlu0 %1290
  %v1292 = vsel %vm154, %v1279, %v1281
  %v1293 = vsel %vm154, %v1281, %v1283
  %v1294 = vsel %vm154, %v1283, %v1285
  %v1295 = vsel %vm154, %v1285, %v1287
  %v1296 = vsel %vm154, %v1287, %v1289
  %v1297 = vsel %vm154, %v1289, %v1291
  %1298 = vrot.lane.b32.xlu0 %v1180, 92
  %v1299 = vpop.permute.xlu0 %1298
  %1300 = vrot.lane.b32.xlu0 %v1181, 92
  %v1301 = vpop.permute.xlu0 %1300
  %1302 = vrot.lane.b32.xlu0 %v1182, 92
  %v1303 = vpop.permute.xlu0 %1302
  %1304 = vrot.lane.b32.xlu0 %v1183, 92
  %v1305 = vpop.permute.xlu0 %1304
  %1306 = vrot.lane.b32.xlu0 %v1184, 92
  %v1307 = vpop.permute.xlu0 %1306
  %1308 = vrot.lane.b32.xlu0 %v1185, 92
  %v1309 = vpop.permute.xlu0 %1308
  %1310 = vrot.lane.b32.xlu0 %v1186, 92
  %v1311 = vpop.permute.xlu0 %1310
  %v1312 = vsel %vm175, %v1299, %v1301
  %v1313 = vsel %vm175, %v1301, %v1303
  %v1314 = vsel %vm175, %v1303, %v1305
  %v1315 = vsel %vm175, %v1305, %v1307
  %v1316 = vsel %vm175, %v1307, %v1309
  %v1317 = vsel %vm175, %v1309, %v1311
  %1318 = vrot.lane.b32.xlu0 %v1180, 91
  %v1319 = vpop.permute.xlu0 %1318
  %1320 = vrot.lane.b32.xlu0 %v1181, 91
  %v1321 = vpop.permute.xlu0 %1320
  %1322 = vrot.lane.b32.xlu0 %v1182, 91
  %v1323 = vpop.permute.xlu0 %1322
  %1324 = vrot.lane.b32.xlu0 %v1183, 91
  %v1325 = vpop.permute.xlu0 %1324
  %1326 = vrot.lane.b32.xlu0 %v1184, 91
  %v1327 = vpop.permute.xlu0 %1326
  %1328 = vrot.lane.b32.xlu0 %v1185, 91
  %v1329 = vpop.permute.xlu0 %1328
  %1330 = vrot.lane.b32.xlu0 %v1186, 91
  %v1331 = vpop.permute.xlu0 %1330
  %v1332 = vsel %vm196, %v1319, %v1321
  %v1333 = vsel %vm196, %v1321, %v1323
  %v1334 = vsel %vm196, %v1323, %v1325
  %v1335 = vsel %vm196, %v1325, %v1327
  %v1336 = vsel %vm196, %v1327, %v1329
  %v1337 = vsel %vm196, %v1329, %v1331
  %1338 = vrot.lane.b32.xlu0 %v1180, 90
  %v1339 = vpop.permute.xlu0 %1338
  %1340 = vrot.lane.b32.xlu0 %v1181, 90
  %v1341 = vpop.permute.xlu0 %1340
  %1342 = vrot.lane.b32.xlu0 %v1182, 90
  %v1343 = vpop.permute.xlu0 %1342
  %1344 = vrot.lane.b32.xlu0 %v1183, 90
  %v1345 = vpop.permute.xlu0 %1344
  %1346 = vrot.lane.b32.xlu0 %v1184, 90
  %v1347 = vpop.permute.xlu0 %1346
  %1348 = vrot.lane.b32.xlu0 %v1185, 90
  %v1349 = vpop.permute.xlu0 %1348
  %1350 = vrot.lane.b32.xlu0 %v1186, 90
  %v1351 = vpop.permute.xlu0 %1350
  %v1352 = vsel %vm217, %v1339, %v1341
  %v1353 = vsel %vm217, %v1341, %v1343
  %v1354 = vsel %vm217, %v1343, %v1345
  %v1355 = vsel %vm217, %v1345, %v1347
  %v1356 = vsel %vm217, %v1347, %v1349
  %v1357 = vsel %vm217, %v1349, %v1351
  %s1358 = scalar_lea.vmem %s2, 16
  %v1359 = vld [vmem:[%s1358] sm:$0xff]
  %1361 = vset.pattern.permute.xlu0 72
  %1362 = vperm.xlu0 %1361, %v1359
  %v1363 = vpop.permute.xlu0 %1362
  %1365 = vrot.lane.b32.xlu0 %v1173, 19
  %v1366 = vpop.permute.xlu0 %1365
  %1367 = vrot.lane.b32.xlu0 %v1174, 19
  %v1368 = vpop.permute.xlu0 %1367
  %1369 = vrot.lane.b32.xlu0 %v1175, 19
  %v1370 = vpop.permute.xlu0 %1369
  %1371 = vrot.lane.b32.xlu0 %v1176, 19
  %v1372 = vpop.permute.xlu0 %1371
  %1373 = vrot.lane.b32.xlu0 %v1177, 19
  %v1374 = vpop.permute.xlu0 %1373
  %1375 = vrot.lane.b32.xlu0 %v1178, 19
  %v1376 = vpop.permute.xlu0 %1375
  %1377 = vrot.lane.b32.xlu0 %v1179, 19
  %v1378 = vpop.permute.xlu0 %1377
  %1379 = vrot.lane.b32.xlu0 %v1208, 19
  %v1380 = vpop.permute.xlu0 %1379
  %1381 = vrot.lane.b32.xlu0 %v1209, 19
  %v1382 = vpop.permute.xlu0 %1381
  %1383 = vrot.lane.b32.xlu0 %v1210, 19
  %v1384 = vpop.permute.xlu0 %1383
  %1385 = vrot.lane.b32.xlu0 %v1211, 19
  %v1386 = vpop.permute.xlu0 %1385
  %1387 = vrot.lane.b32.xlu0 %v1212, 19
  %v1388 = vpop.permute.xlu0 %1387
  %1389 = vrot.lane.b32.xlu0 %v1213, 19
  %v1390 = vpop.permute.xlu0 %1389
  %1391 = vrot.lane.b32.xlu0 %v1207, 19
  %v1392 = vpop.permute.xlu0 %1391
  %1393 = vrot.lane.b32.xlu0 %v1228, 19
  %v1394 = vpop.permute.xlu0 %1393
  %1395 = vrot.lane.b32.xlu0 %v1229, 19
  %v1396 = vpop.permute.xlu0 %1395
  %1397 = vrot.lane.b32.xlu0 %v1230, 19
  %v1398 = vpop.permute.xlu0 %1397
  %1399 = vrot.lane.b32.xlu0 %v1231, 19
  %v1400 = vpop.permute.xlu0 %1399
  %1401 = vrot.lane.b32.xlu0 %v1232, 19
  %v1402 = vpop.permute.xlu0 %1401
  %1403 = vrot.lane.b32.xlu0 %v1233, 19
  %v1404 = vpop.permute.xlu0 %1403
  %1405 = vrot.lane.b32.xlu0 %v1227, 19
  %v1406 = vpop.permute.xlu0 %1405
  %1407 = vrot.lane.b32.xlu0 %v1248, 19
  %v1408 = vpop.permute.xlu0 %1407
  %1409 = vrot.lane.b32.xlu0 %v1249, 19
  %v1410 = vpop.permute.xlu0 %1409
  %1411 = vrot.lane.b32.xlu0 %v1250, 19
  %v1412 = vpop.permute.xlu0 %1411
  %1413 = vrot.lane.b32.xlu0 %v1251, 19
  %v1414 = vpop.permute.xlu0 %1413
  %1415 = vrot.lane.b32.xlu0 %v1252, 19
  %v1416 = vpop.permute.xlu0 %1415
  %1417 = vrot.lane.b32.xlu0 %v1253, 19
  %v1418 = vpop.permute.xlu0 %1417
  %1419 = vrot.lane.b32.xlu0 %v1247, 19
  %v1420 = vpop.permute.xlu0 %1419
  %1421 = vrot.lane.b32.xlu0 %v1255, 19
  %v1422 = vpop.permute.xlu0 %1421
  %1423 = vrot.lane.b32.xlu0 %v1266, 19
  %v1424 = vpop.permute.xlu0 %1423
  %1425 = vrot.lane.b32.xlu0 %v1267, 19
  %v1426 = vpop.permute.xlu0 %1425
  %1427 = vrot.lane.b32.xlu0 %v1268, 19
  %v1428 = vpop.permute.xlu0 %1427
  %1429 = vrot.lane.b32.xlu0 %v1269, 19
  %v1430 = vpop.permute.xlu0 %1429
  %1431 = vrot.lane.b32.xlu0 %v1270, 19
  %v1432 = vpop.permute.xlu0 %1431
  %1433 = vrot.lane.b32.xlu0 %v1265, 19
  %v1434 = vpop.permute.xlu0 %1433
  %1435 = vrot.lane.b32.xlu0 %v1279, 19
  %v1436 = vpop.permute.xlu0 %1435
  %1437 = vrot.lane.b32.xlu0 %v1292, 19
  %v1438 = vpop.permute.xlu0 %1437
  %1439 = vrot.lane.b32.xlu0 %v1293, 19
  %v1440 = vpop.permute.xlu0 %1439
  %1441 = vrot.lane.b32.xlu0 %v1294, 19
  %v1442 = vpop.permute.xlu0 %1441
  %1443 = vrot.lane.b32.xlu0 %v1295, 19
  %v1444 = vpop.permute.xlu0 %1443
  %1445 = vrot.lane.b32.xlu0 %v1296, 19
  %v1446 = vpop.permute.xlu0 %1445
  %1447 = vrot.lane.b32.xlu0 %v1297, 19
  %v1448 = vpop.permute.xlu0 %1447
  %1449 = vrot.lane.b32.xlu0 %v1299, 19
  %v1450 = vpop.permute.xlu0 %1449
  %1451 = vrot.lane.b32.xlu0 %v1312, 19
  %v1452 = vpop.permute.xlu0 %1451
  %1453 = vrot.lane.b32.xlu0 %v1313, 19
  %v1454 = vpop.permute.xlu0 %1453
  %1455 = vrot.lane.b32.xlu0 %v1314, 19
  %v1456 = vpop.permute.xlu0 %1455
  %1457 = vrot.lane.b32.xlu0 %v1315, 19
  %v1458 = vpop.permute.xlu0 %1457
  %1459 = vrot.lane.b32.xlu0 %v1316, 19
  %v1460 = vpop.permute.xlu0 %1459
  %1461 = vrot.lane.b32.xlu0 %v1317, 19
  %v1462 = vpop.permute.xlu0 %1461
  %1463 = vrot.lane.b32.xlu0 %v1319, 19
  %v1464 = vpop.permute.xlu0 %1463
  %1465 = vrot.lane.b32.xlu0 %v1332, 19
  %v1466 = vpop.permute.xlu0 %1465
  %1467 = vrot.lane.b32.xlu0 %v1333, 19
  %v1468 = vpop.permute.xlu0 %1467
  %1469 = vrot.lane.b32.xlu0 %v1334, 19
  %v1470 = vpop.permute.xlu0 %1469
  %1471 = vrot.lane.b32.xlu0 %v1335, 19
  %v1472 = vpop.permute.xlu0 %1471
  %1473 = vrot.lane.b32.xlu0 %v1336, 19
  %v1474 = vpop.permute.xlu0 %1473
  %1475 = vrot.lane.b32.xlu0 %v1337, 19
  %v1476 = vpop.permute.xlu0 %1475
  %1477 = vrot.lane.b32.xlu0 %v1339, 19
  %v1478 = vpop.permute.xlu0 %1477
  %1479 = vrot.lane.b32.xlu0 %v1352, 19
  %v1480 = vpop.permute.xlu0 %1479
  %1481 = vrot.lane.b32.xlu0 %v1353, 19
  %v1482 = vpop.permute.xlu0 %1481
  %1483 = vrot.lane.b32.xlu0 %v1354, 19
  %v1484 = vpop.permute.xlu0 %1483
  %1485 = vrot.lane.b32.xlu0 %v1355, 19
  %v1486 = vpop.permute.xlu0 %1485
  %1487 = vrot.lane.b32.xlu0 %v1356, 19
  %v1488 = vpop.permute.xlu0 %1487
  %1489 = vrot.lane.b32.xlu0 %v1357, 19
  %v1490 = vpop.permute.xlu0 %1489
  %v1491 = vsel %vm356, %v1366, %v1368
  %v1492 = vsel %vm356, %v1368, %v1370
  %v1493 = vsel %vm356, %v1370, %v1372
  %v1494 = vsel %vm356, %v1372, %v1374
  %v1495 = vsel %vm356, %v1374, %v1376
  %v1496 = vsel %vm356, %v1376, %v1378
  %v1497 = vsel %vm356, %v1380, %v1382
  %v1498 = vsel %vm356, %v1382, %v1384
  %v1499 = vsel %vm356, %v1384, %v1386
  %v1500 = vsel %vm356, %v1386, %v1388
  %v1501 = vsel %vm356, %v1388, %v1390
  %v1502 = vsel %vm356, %v1390, %v1392
  %v1503 = vsel %vm356, %v1394, %v1396
  %v1504 = vsel %vm356, %v1396, %v1398
  %v1505 = vsel %vm356, %v1398, %v1400
  %v1506 = vsel %vm356, %v1400, %v1402
  %v1507 = vsel %vm356, %v1402, %v1404
  %v1508 = vsel %vm356, %v1404, %v1406
  %v1509 = vsel %vm356, %v1408, %v1410
  %v1510 = vsel %vm356, %v1410, %v1412
  %v1511 = vsel %vm356, %v1412, %v1414
  %v1512 = vsel %vm356, %v1414, %v1416
  %v1513 = vsel %vm356, %v1416, %v1418
  %v1514 = vsel %vm356, %v1418, %v1420
  %v1515 = vsel %vm356, %v1422, %v1424
  %v1516 = vsel %vm356, %v1424, %v1426
  %v1517 = vsel %vm356, %v1426, %v1428
  %v1518 = vsel %vm356, %v1428, %v1430
  %v1519 = vsel %vm356, %v1430, %v1432
  %v1520 = vsel %vm356, %v1432, %v1434
  %v1521 = vsel %vm356, %v1436, %v1438
  %v1522 = vsel %vm356, %v1438, %v1440
  %v1523 = vsel %vm356, %v1440, %v1442
  %v1524 = vsel %vm356, %v1442, %v1444
  %v1525 = vsel %vm356, %v1444, %v1446
  %v1526 = vsel %vm356, %v1446, %v1448
  %v1527 = vsel %vm356, %v1450, %v1452
  %v1528 = vsel %vm356, %v1452, %v1454
  %v1529 = vsel %vm356, %v1454, %v1456
  %v1530 = vsel %vm356, %v1456, %v1458
  %v1531 = vsel %vm356, %v1458, %v1460
  %v1532 = vsel %vm356, %v1460, %v1462
  %v1533 = vsel %vm356, %v1464, %v1466
  %v1534 = vsel %vm356, %v1466, %v1468
  %v1535 = vsel %vm356, %v1468, %v1470
  %v1536 = vsel %vm356, %v1470, %v1472
  %v1537 = vsel %vm356, %v1472, %v1474
  %v1538 = vsel %vm356, %v1474, %v1476
  %v1539 = vsel %vm356, %v1478, %v1480
  %v1540 = vsel %vm356, %v1480, %v1482
  %v1541 = vsel %vm356, %v1482, %v1484
  %v1542 = vsel %vm356, %v1484, %v1486
  %v1543 = vsel %vm356, %v1486, %v1488
  %v1544 = vsel %vm356, %v1488, %v1490
  %v1599 = vsel %vm465, %v1359, 0
  %1601 = vmatpush.msra.mxu0 0.0
  %1602 = vmatpush.msra.mxu0 0.0
  %1603 = vmatpush.msra.mxu0 0.0
  %1604 = vmatpush.msra.mxu0 0.0
  %1605 = vmatpush.msra.mxu0 0.0
  %1606 = vmatpush.msra.mxu0 0.0
  %1607 = vmatpush.msra.mxu0 0.0
  %1608 = vmatpush.msra.mxu0 %v1539
  %1609 = vmatpush.msra.mxu0 %v1533
  %1610 = vmatpush.msra.mxu0 %v1527
  %1611 = vmatpush.msra.mxu0 %v1521
  %1612 = vmatpush.msra.mxu0 %v1515
  %1613 = vmatpush.msra.mxu0 %v1509
  %1614 = vmatpush.msra.mxu0 %v1503
  %1615 = vmatpush.msra.mxu0 %v1497
  %1616 = vmatpush.msra.mxu0 %v1491
  %1617 = vmatmul.f32.gmra.mxu0 %v1599
  %v1618 = vpop.f32.mrf.mxu0
  %v1619 = vadd.f32 %v1363, %v1618
  %1620 = vdwg.mxu0
  %1621 = vmatpush.msra.mxu0 0.0
  %1622 = vmatpush.msra.mxu0 0.0
  %1623 = vmatpush.msra.mxu0 0.0
  %1624 = vmatpush.msra.mxu0 0.0
  %1625 = vmatpush.msra.mxu0 0.0
  %1626 = vmatpush.msra.mxu0 0.0
  %1627 = vmatpush.msra.mxu0 0.0
  %1628 = vmatpush.msra.mxu0 %v1540
  %1629 = vmatpush.msra.mxu0 %v1534
  %1630 = vmatpush.msra.mxu0 %v1528
  %1631 = vmatpush.msra.mxu0 %v1522
  %1632 = vmatpush.msra.mxu0 %v1516
  %1633 = vmatpush.msra.mxu0 %v1510
  %1634 = vmatpush.msra.mxu0 %v1504
  %1635 = vmatpush.msra.mxu0 %v1498
  %1636 = vmatpush.msra.mxu0 %v1492
  %1637 = vmatmul.f32.gmra.mxu0 %v1599
  %v1638 = vpop.f32.mrf.mxu0
  %v1639 = vadd.f32 %v1363, %v1638
  %1640 = vdwg.mxu0
  %1641 = vmatpush.msra.mxu0 0.0
  %1642 = vmatpush.msra.mxu0 0.0
  %1643 = vmatpush.msra.mxu0 0.0
  %1644 = vmatpush.msra.mxu0 0.0
  %1645 = vmatpush.msra.mxu0 0.0
  %1646 = vmatpush.msra.mxu0 0.0
  %1647 = vmatpush.msra.mxu0 0.0
  %1648 = vmatpush.msra.mxu0 %v1541
  %1649 = vmatpush.msra.mxu0 %v1535
  %1650 = vmatpush.msra.mxu0 %v1529
  %1651 = vmatpush.msra.mxu0 %v1523
  %1652 = vmatpush.msra.mxu0 %v1517
  %1653 = vmatpush.msra.mxu0 %v1511
  %1654 = vmatpush.msra.mxu0 %v1505
  %1655 = vmatpush.msra.mxu0 %v1499
  %1656 = vmatpush.msra.mxu0 %v1493
  %1657 = vmatmul.f32.gmra.mxu0 %v1599
  %v1658 = vpop.f32.mrf.mxu0
  %v1659 = vadd.f32 %v1363, %v1658
  %1660 = vdwg.mxu0
  %1661 = vmatpush.msra.mxu0 0.0
  %1662 = vmatpush.msra.mxu0 0.0
  %1663 = vmatpush.msra.mxu0 0.0
  %1664 = vmatpush.msra.mxu0 0.0
  %1665 = vmatpush.msra.mxu0 0.0
  %1666 = vmatpush.msra.mxu0 0.0
  %1667 = vmatpush.msra.mxu0 0.0
  %1668 = vmatpush.msra.mxu0 %v1542
  %1669 = vmatpush.msra.mxu0 %v1536
  %1670 = vmatpush.msra.mxu0 %v1530
  %1671 = vmatpush.msra.mxu0 %v1524
  %1672 = vmatpush.msra.mxu0 %v1518
  %1673 = vmatpush.msra.mxu0 %v1512
  %1674 = vmatpush.msra.mxu0 %v1506
  %1675 = vmatpush.msra.mxu0 %v1500
  %1676 = vmatpush.msra.mxu0 %v1494
  %1677 = vmatmul.f32.gmra.mxu0 %v1599
  %v1678 = vpop.f32.mrf.mxu0
  %v1679 = vadd.f32 %v1363, %v1678
  %1680 = vdwg.mxu0
  %1681 = vmatpush.msra.mxu0 0.0
  %1682 = vmatpush.msra.mxu0 0.0
  %1683 = vmatpush.msra.mxu0 0.0
  %1684 = vmatpush.msra.mxu0 0.0
  %1685 = vmatpush.msra.mxu0 0.0
  %1686 = vmatpush.msra.mxu0 0.0
  %1687 = vmatpush.msra.mxu0 0.0
  %1688 = vmatpush.msra.mxu0 %v1543
  %1689 = vmatpush.msra.mxu0 %v1537
  %1690 = vmatpush.msra.mxu0 %v1531
  %1691 = vmatpush.msra.mxu0 %v1525
  %1692 = vmatpush.msra.mxu0 %v1519
  %1693 = vmatpush.msra.mxu0 %v1513
  %1694 = vmatpush.msra.mxu0 %v1507
  %1695 = vmatpush.msra.mxu0 %v1501
  %1696 = vmatpush.msra.mxu0 %v1495
  %1697 = vmatmul.f32.gmra.mxu0 %v1599
  %v1698 = vpop.f32.mrf.mxu0
  %v1699 = vadd.f32 %v1363, %v1698
  %1700 = vdwg.mxu0
  %1701 = vmatpush.msra.mxu0 0.0
  %1702 = vmatpush.msra.mxu0 0.0
  %1703 = vmatpush.msra.mxu0 0.0
  %1704 = vmatpush.msra.mxu0 0.0
  %1705 = vmatpush.msra.mxu0 0.0
  %1706 = vmatpush.msra.mxu0 0.0
  %1707 = vmatpush.msra.mxu0 0.0
  %1708 = vmatpush.msra.mxu0 %v1544
  %1709 = vmatpush.msra.mxu0 %v1538
  %1710 = vmatpush.msra.mxu0 %v1532
  %1711 = vmatpush.msra.mxu0 %v1526
  %1712 = vmatpush.msra.mxu0 %v1520
  %1713 = vmatpush.msra.mxu0 %v1514
  %1714 = vmatpush.msra.mxu0 %v1508
  %1715 = vmatpush.msra.mxu0 %v1502
  %1716 = vmatpush.msra.mxu0 %v1496
  %1717 = vmatmul.f32.gmra.mxu0 %v1599
  %v1718 = vpop.f32.mrf.mxu0
  %v1719 = vadd.f32 %v1363, %v1718
  %1720 = vdwg.mxu0
  %1721 = vst [vmem:[%s3] sm:$0x3f] %v1619
  %1722 = vst [vmem:[%s3 + $0x8] sm:$0x3f] %v1639
  %1723 = vst [vmem:[%s3 + $0x10] sm:$0x3f] %v1659
  %1724 = vst [vmem:[%s3 + $0x18] sm:$0x3f] %v1679
  %1725 = vst [vmem:[%s3 + $0x20] sm:$0x3f] %v1699
  %1726 = vst [vmem:[%s3 + $0x28] sm:$0x3f] %v1719
  // Predicated region
  $region14: #{alinet_forward.1} parent=0 // pred_check
    _
  $region15: #{alinet_forward.1} parent=0 // pred_check_branch
    %1728 = sbr.rel (0) target = $region17
  $region16: #{alinet_forward.1} parent=0 // pred_region
    _
  $region17: #{alinet_forward.1} parent=0 // pred_fallthru
    _
  // Predicated region
  $region18: #{alinet_forward.1} parent=0 // pred_check
    _
  $region19: #{alinet_forward.1} parent=0 // pred_check_branch
    %1730 = sbr.rel (0) target = $region21
  $region20: #{alinet_forward.1} parent=0 // pred_region
    _
  $region21: #{alinet_forward.1} parent=0 // pred_fallthru
    _

</llo_original>
